<compile_context>
chip_gen: v7x
topology: tpu7x:2x2x1
jax: 0.10.0
libtpu: 0.0.40
codegen_flags: <defaults>
</compile_context>

<pallas_src>
import math
import jax
import jax.numpy as jnp
from jax.experimental import pallas as pl
from jax.experimental.pallas import tpu as pltpu

# ---- model hyper-parameters (small, consistent with the module) -------------
B = 2        # batch
S = 8        # sequence length
D = 32       # d_model (== `size`)
H = 4        # attention heads
DK = D // H  # per-head dim
DFF = 64     # feed-forward hidden dim
EPS = 1e-6
NEG_INF = -1e9

# packed-weight column layout: [ W_qkv (3D) | W_o (D) | W1 (DFF) | W2 (D) ]
QKV0, QKV1 = 0, 3 * D
WO0, WO1 = 3 * D, 4 * D
W10, W11 = 4 * D, 4 * D + DFF
W20, W21 = 4 * D + DFF, 4 * D + DFF + D
WCOLS = W21                 # 224
WROWS = max(D, DFF)         # 64 (W2 needs DFF rows; the rest use D rows)


def _ln_no_affine(x):
    # (x - mean) / (std + eps); unbiased std; gamma/beta folded into the weights.
    mu = jnp.mean(x, axis=-1, keepdims=True)
    var = jnp.sum((x - mu) ** 2, axis=-1, keepdims=True) * (1.0 / (x.shape[-1] - 1))
    return (x - mu) / (jnp.sqrt(var) + EPS)


def encoder_layer_kernel(x_ref, mask_ref, wpack_ref, bpack_ref, out_ref):
    x = x_ref[...]                                           # (B, S, D)

    # ---------------- sublayer 0: multi-head self-attention ------------------
    y2d = _ln_no_affine(x).reshape(B * S, D)                 # LN1 affine folded in
    qkv = jnp.dot(y2d, wpack_ref[0:D, QKV0:QKV1],
                  preferred_element_type=jnp.float32) + bpack_ref[0:1, QKV0:QKV1]

    def split_heads(off):                                    # (B*S, D) -> (B*H, S, DK)
        parts = [qkv[:, off + h * DK: off + (h + 1) * DK].reshape(B, 1, S, DK)
                 for h in range(H)]
        return jnp.concatenate(parts, axis=1).reshape(B * H, S, DK)

    q = split_heads(0)            # 1/sqrt(dk) already folded into the Q weights
    k = split_heads(D)
    v = split_heads(2 * D)

    scores = jnp.einsum("gqd,gkd->gqk", q, k,
                        preferred_element_type=jnp.float32)  # (B*H, S, S)
    bias = jnp.where(mask_ref[...] != 0, 0.0, NEG_INF)       # (B, 1, S)
    bias = jnp.broadcast_to(bias[:, None, :, :], (B, H, 1, S)).reshape(B * H, 1, S)
    scores = scores + bias

    m = jnp.max(scores, axis=-1, keepdims=True)
    e = jnp.exp(scores - m)
    p = e / jnp.sum(e, axis=-1, keepdims=True)

    ctx = jnp.einsum("gqk,gkd->gqd", p, v,
                     preferred_element_type=jnp.float32)     # (B*H, S, DK)
    ctx4 = ctx.reshape(B, H, S, DK)
    ctx2d = jnp.concatenate([ctx4[:, h] for h in range(H)], axis=-1)  # (B, S, D)
    ctx2d = ctx2d.reshape(B * S, D)

    attn = jnp.dot(ctx2d, wpack_ref[0:D, WO0:WO1],
                   preferred_element_type=jnp.float32) + bpack_ref[0:1, WO0:WO1]
    x1 = x + attn.reshape(B, S, D)                           # residual (dropout == id)

    # ---------------- sublayer 1: position-wise feed forward -----------------
    y2 = _ln_no_affine(x1).reshape(B * S, D)                 # LN2 affine folded in
    hid = jnp.maximum(
        jnp.dot(y2, wpack_ref[0:D, W10:W11],
                preferred_element_type=jnp.float32) + bpack_ref[0:1, W10:W11], 0.0)
    ff = jnp.dot(hid, wpack_ref[0:DFF, W20:W21],
                 preferred_element_type=jnp.float32) + bpack_ref[0:1, W20:W21]

    out_ref[...] = (x1 + ff.reshape(B, S, D)).astype(out_ref.dtype)


@jax.jit
def encoder_layer(x, mask, wpack, bpack):
    """x: [B,S,D] f32; mask: [B,1,S] f32 (nonzero == attend); packed params."""
    return pl.pallas_call(
        encoder_layer_kernel,
        out_shape=jax.ShapeDtypeStruct((B, S, D), jnp.float32),
        grid_spec=pltpu.PrefetchScalarGridSpec(
            num_scalar_prefetch=0,
            grid=(1,),                       # whole problem in one step, all generations
            in_specs=[
                pl.BlockSpec((B, S, D), lambda i: (0, 0, 0)),      # x
                pl.BlockSpec((B, 1, S), lambda i: (0, 0, 0)),      # mask
                pl.BlockSpec((WROWS, WCOLS), lambda i: (0, 0)),    # packed weights
                pl.BlockSpec((1, WCOLS), lambda i: (0, 0)),        # packed biases
            ],
            out_specs=pl.BlockSpec((B, S, D), lambda i: (0, 0, 0)),
        ),
        compiler_params=pltpu.CompilerParams(
            dimension_semantics=("arbitrary",)),
    )(x, mask, wpack, bpack)


# ---------------- one-time parameter prep (outside the hot path) -------------
def pack_params(params):
    (ln1_g, ln1_b, wq, bq, wk, bk, wv, bv, wo, bo,
     ln2_g, ln2_b, w1, b1, w2, b2) = params
    g1, be1 = ln1_g.reshape(D), ln1_b.reshape(D)
    g2, be2 = ln2_g.reshape(D), ln2_b.reshape(D)
    scale = 1.0 / math.sqrt(DK)

    # Fold LN1 affine into the QKV projection; fold 1/sqrt(dk) into Q.
    wq_f = (g1[:, None] * wq) * scale
    wk_f = g1[:, None] * wk
    wv_f = g1[:, None] * wv
    bq_f = (be1 @ wq + bq.reshape(D)) * scale
    bk_f = be1 @ wk + bk.reshape(D)
    bv_f = be1 @ wv + bv.reshape(D)
    wqkv = jnp.concatenate([wq_f, wk_f, wv_f], axis=1)        # (D, 3D)
    bqkv = jnp.concatenate([bq_f, bk_f, bv_f], axis=0)        # (3D,)

    # Fold LN2 affine into W1/b1.
    w1_f = g2[:, None] * w1
    b1_f = be2 @ w1 + b1.reshape(DFF)

    wpack = jnp.zeros((WROWS, WCOLS), jnp.float32)
    wpack = wpack.at[0:D, QKV0:QKV1].set(wqkv)
    wpack = wpack.at[0:D, WO0:WO1].set(wo)
    wpack = wpack.at[0:D, W10:W11].set(w1_f)
    wpack = wpack.at[0:DFF, W20:W21].set(w2)
    bpack = jnp.concatenate([bqkv, bo.reshape(D), b1_f, b2.reshape(D)])[None, :]
    return wpack, bpack


def init_params(key):
    ks = jax.random.split(key, 8)
    s_attn = 1.0 / math.sqrt(D)
    s_ff1 = 1.0 / math.sqrt(D)
    s_ff2 = 1.0 / math.sqrt(DFF)
    ln1_g = jnp.ones((1, D), jnp.float32)
    ln1_b = jnp.zeros((1, D), jnp.float32)
    wq = jax.random.normal(ks[0], (D, D), jnp.float32) * s_attn
    wk = jax.random.normal(ks[1], (D, D), jnp.float32) * s_attn
    wv = jax.random.normal(ks[2], (D, D), jnp.float32) * s_attn
    wo = jax.random.normal(ks[3], (D, D), jnp.float32) * s_attn
    bq = jnp.zeros((1, D), jnp.float32)
    bk = jnp.zeros((1, D), jnp.float32)
    bv = jnp.zeros((1, D), jnp.float32)
    bo = jnp.zeros((1, D), jnp.float32)
    ln2_g = jnp.ones((1, D), jnp.float32)
    ln2_b = jnp.zeros((1, D), jnp.float32)
    w1 = jax.random.normal(ks[4], (D, DFF), jnp.float32) * s_ff1
    b1 = jax.random.normal(ks[5], (1, DFF), jnp.float32) * 0.01
    w2 = jax.random.normal(ks[6], (DFF, D), jnp.float32) * s_ff2
    b2 = jax.random.normal(ks[7], (1, D), jnp.float32) * 0.01
    return (ln1_g, ln1_b, wq, bq, wk, bk, wv, bv, wo, bo,
            ln2_g, ln2_b, w1, b1, w2, b2)


def reference(x, mask, params):
    """Pure-JAX reference of the original (unfolded) module, high precision."""
    (ln1_g, ln1_b, wq, bq, wk, bk, wv, bv, wo, bo,
     ln2_g, ln2_b, w1, b1, w2, b2) = params
    hp = jax.lax.Precision.HIGHEST

    def ln(t, g, b):
        mu = jnp.mean(t, axis=-1, keepdims=True)
        var = jnp.sum((t - mu) ** 2, axis=-1, keepdims=True) / (t.shape[-1] - 1)
        return g * (t - mu) / (jnp.sqrt(var) + EPS) + b

    def heads(t):
        return t.reshape(B, S, H, DK).transpose(0, 2, 1, 3)

    y = ln(x, ln1_g, ln1_b)
    q = heads(jnp.einsum("bsd,df->bsf", y, wq, precision=hp) + bq)
    k = heads(jnp.einsum("bsd,df->bsf", y, wk, precision=hp) + bk)
    v = heads(jnp.einsum("bsd,df->bsf", y, wv, precision=hp) + bv)
    sc = jnp.einsum("bhqd,bhkd->bhqk", q, k, precision=hp) / math.sqrt(DK)
    sc = jnp.where(mask[:, None, :, :] != 0, sc, NEG_INF)
    p = jax.nn.softmax(sc, axis=-1)
    ctx = jnp.einsum("bhqk,bhkd->bhqd", p, v, precision=hp)
    ctx = ctx.transpose(0, 2, 1, 3).reshape(B, S, D)
    x1 = x + jnp.einsum("bsd,df->bsf", ctx, wo, precision=hp) + bo
    y2 = ln(x1, ln2_g, ln2_b)
    hid = jnp.maximum(jnp.einsum("bsd,df->bsf", y2, w1, precision=hp) + b1, 0.0)
    ff = jnp.einsum("bsd,df->bsf", hid, w2, precision=hp) + b2
    return x1 + ff


if __name__ == "__main__":
    key = jax.random.PRNGKey(0)
    kx, kp = jax.random.split(key)
    x = jax.random.normal(kx, (B, S, D), jnp.float32)
    # mask: batch 0 attends everywhere; batch 1 masks out the last 2 positions.
    mask = jnp.ones((B, 1, S), jnp.float32)
    mask = mask.at[1, 0, S - 2:].set(0.0)

    params = init_params(kp)
    wpack, bpack = pack_params(params)   # one-time prep: pack + fold LN affine / qk scale

    out = encoder_layer(x, mask, wpack, bpack)
    jax.block_until_ready(out)
    assert out.shape == (B, S, D)
    assert bool(jnp.all(jnp.isfinite(out)))

    ref = reference(x, mask, params)
    err = float(jnp.max(jnp.abs(out - ref)))
    assert err < 5e-3, f"max abs error vs reference: {err}"
    print("KERNEL_OK")
</pallas_src>

<mosaic_0001>
module attributes {stable_mosaic.version = 11 : i64} {
  func.func @encoder_layer_kernel(%arg0: i32, %arg1: memref<2x8x32xf32, #tpu.memory_space<vmem>>, %arg2: memref<2x1x8xf32, #tpu.memory_space<vmem>>, %arg3: memref<64x224xf32, #tpu.memory_space<vmem>>, %arg4: memref<1x224xf32, #tpu.memory_space<vmem>>, %arg5: memref<2x8x32xf32, #tpu.memory_space<vmem>>) attributes {dimension_semantics = [#tpu.dimension_semantics<arbitrary>], iteration_bounds = array<i64: 1>, scalar_prefetch = 0 : i64, scratch_operands = 0 : i64, tpu.core_type = #tpu.core_type<tc>, window_params = [{pipeline_mode = #tpu.pipeline_mode<synchronous>, transform_indices = @transform_0, window_bounds = array<i64: 2, 8, 32>}, {pipeline_mode = #tpu.pipeline_mode<synchronous>, transform_indices = @transform_1, window_bounds = array<i64: 2, 1, 8>}, {pipeline_mode = #tpu.pipeline_mode<synchronous>, transform_indices = @transform_2, window_bounds = array<i64: 64, 224>}, {pipeline_mode = #tpu.pipeline_mode<synchronous>, transform_indices = @transform_3, window_bounds = array<i64: 1, 224>}, {pipeline_mode = #tpu.pipeline_mode<synchronous>, transform_indices = @transform_4, window_bounds = array<i64: 2, 8, 32>}]} {
    %c0 = arith.constant 0 : index
    %c0_0 = arith.constant 0 : index
    %c0_1 = arith.constant 0 : index
    %0 = vector.load %arg1[%c0, %c0_0, %c0_1] : memref<2x8x32xf32, #tpu.memory_space<vmem>>, vector<2x8x32xf32>
    %cst = arith.constant dense<0.000000e+00> : vector<2x8xf32>
    %1 = vector.multi_reduction <add>, %0, %cst [2] : vector<2x8x32xf32> to vector<2x8xf32>
    %2 = vector.shape_cast %1 : vector<2x8xf32> to vector<2x8x1xf32>
    %cst_2 = arith.constant 3.200000e+01 : f32
    %3 = vector.broadcast %cst_2 : f32 to vector<2x8x1xf32>
    %4 = arith.divf %2, %3 : vector<2x8x1xf32>
    %5 = vector.broadcast %4 : vector<2x8x1xf32> to vector<2x8x32xf32>
    %6 = arith.subf %0, %5 : vector<2x8x32xf32>
    %7 = arith.mulf %6, %6 : vector<2x8x32xf32>
    %cst_3 = arith.constant dense<0.000000e+00> : vector<2x8xf32>
    %8 = vector.multi_reduction <add>, %7, %cst_3 [2] : vector<2x8x32xf32> to vector<2x8xf32>
    %9 = vector.shape_cast %8 : vector<2x8xf32> to vector<2x8x1xf32>
    %cst_4 = arith.constant 0.0322580636 : f32
    %10 = vector.broadcast %cst_4 : f32 to vector<2x8x1xf32>
    %11 = arith.mulf %9, %10 : vector<2x8x1xf32>
    %12 = vector.broadcast %4 : vector<2x8x1xf32> to vector<2x8x32xf32>
    %13 = arith.subf %0, %12 : vector<2x8x32xf32>
    %14 = math.sqrt %11 : vector<2x8x1xf32>
    %cst_5 = arith.constant 9.99999997E-7 : f32
    %15 = vector.broadcast %cst_5 : f32 to vector<2x8x1xf32>
    %16 = arith.addf %14, %15 : vector<2x8x1xf32>
    %17 = vector.broadcast %16 : vector<2x8x1xf32> to vector<2x8x32xf32>
    %18 = arith.divf %13, %17 : vector<2x8x32xf32>
    %19 = vector.shape_cast %18 : vector<2x8x32xf32> to vector<16x32xf32>
    %c0_6 = arith.constant 0 : index
    %c0_7 = arith.constant 0 : index
    %20 = vector.load %arg3[%c0_6, %c0_7] : memref<64x224xf32, #tpu.memory_space<vmem>>, vector<32x96xf32>
    %cst_8 = arith.constant dense<0.000000e+00> : vector<16x96xf32>
    %21 = tpu.matmul %19, %20, %cst_8 {dimension_numbers = #tpu.dot_dimension_numbers<[1], [0], [0], [1], [0, 0, 1, 1], [], []>} : vector<16x32xf32>, vector<32x96xf32>, vector<16x96xf32> -> vector<16x96xf32>
    %c0_9 = arith.constant 0 : index
    %c0_10 = arith.constant 0 : index
    %22 = vector.load %arg4[%c0_9, %c0_10] : memref<1x224xf32, #tpu.memory_space<vmem>>, vector<1x96xf32>
    %23 = vector.broadcast %22 : vector<1x96xf32> to vector<16x96xf32>
    %24 = arith.addf %21, %23 : vector<16x96xf32>
    %25 = vector.extract_strided_slice %24 {offsets = [0, 0], sizes = [16, 8], strides = [1, 1]} : vector<16x96xf32> to vector<16x8xf32>
    %26 = vector.shape_cast %25 : vector<16x8xf32> to vector<2x1x8x8xf32>
    %27 = vector.extract_strided_slice %24 {offsets = [0, 8], sizes = [16, 8], strides = [1, 1]} : vector<16x96xf32> to vector<16x8xf32>
    %28 = vector.shape_cast %27 : vector<16x8xf32> to vector<2x1x8x8xf32>
    %29 = vector.extract_strided_slice %24 {offsets = [0, 16], sizes = [16, 8], strides = [1, 1]} : vector<16x96xf32> to vector<16x8xf32>
    %30 = vector.shape_cast %29 : vector<16x8xf32> to vector<2x1x8x8xf32>
    %31 = vector.extract_strided_slice %24 {offsets = [0, 24], sizes = [16, 8], strides = [1, 1]} : vector<16x96xf32> to vector<16x8xf32>
    %32 = vector.shape_cast %31 : vector<16x8xf32> to vector<2x1x8x8xf32>
    %33 = tpu.concatenate %26, %28, %30, %32 in 1 : vector<2x1x8x8xf32>, vector<2x1x8x8xf32>, vector<2x1x8x8xf32>, vector<2x1x8x8xf32> -> vector<2x4x8x8xf32>
    %34 = vector.shape_cast %33 : vector<2x4x8x8xf32> to vector<8x8x8xf32>
    %35 = vector.extract_strided_slice %24 {offsets = [0, 32], sizes = [16, 8], strides = [1, 1]} : vector<16x96xf32> to vector<16x8xf32>
    %36 = vector.shape_cast %35 : vector<16x8xf32> to vector<2x1x8x8xf32>
    %37 = vector.extract_strided_slice %24 {offsets = [0, 40], sizes = [16, 8], strides = [1, 1]} : vector<16x96xf32> to vector<16x8xf32>
    %38 = vector.shape_cast %37 : vector<16x8xf32> to vector<2x1x8x8xf32>
    %39 = vector.extract_strided_slice %24 {offsets = [0, 48], sizes = [16, 8], strides = [1, 1]} : vector<16x96xf32> to vector<16x8xf32>
    %40 = vector.shape_cast %39 : vector<16x8xf32> to vector<2x1x8x8xf32>
    %41 = vector.extract_strided_slice %24 {offsets = [0, 56], sizes = [16, 8], strides = [1, 1]} : vector<16x96xf32> to vector<16x8xf32>
    %42 = vector.shape_cast %41 : vector<16x8xf32> to vector<2x1x8x8xf32>
    %43 = tpu.concatenate %36, %38, %40, %42 in 1 : vector<2x1x8x8xf32>, vector<2x1x8x8xf32>, vector<2x1x8x8xf32>, vector<2x1x8x8xf32> -> vector<2x4x8x8xf32>
    %44 = vector.shape_cast %43 : vector<2x4x8x8xf32> to vector<8x8x8xf32>
    %45 = vector.extract_strided_slice %24 {offsets = [0, 64], sizes = [16, 8], strides = [1, 1]} : vector<16x96xf32> to vector<16x8xf32>
    %46 = vector.shape_cast %45 : vector<16x8xf32> to vector<2x1x8x8xf32>
    %47 = vector.extract_strided_slice %24 {offsets = [0, 72], sizes = [16, 8], strides = [1, 1]} : vector<16x96xf32> to vector<16x8xf32>
    %48 = vector.shape_cast %47 : vector<16x8xf32> to vector<2x1x8x8xf32>
    %49 = vector.extract_strided_slice %24 {offsets = [0, 80], sizes = [16, 8], strides = [1, 1]} : vector<16x96xf32> to vector<16x8xf32>
    %50 = vector.shape_cast %49 : vector<16x8xf32> to vector<2x1x8x8xf32>
    %51 = vector.extract_strided_slice %24 {offsets = [0, 88], sizes = [16, 8], strides = [1, 1]} : vector<16x96xf32> to vector<16x8xf32>
    %52 = vector.shape_cast %51 : vector<16x8xf32> to vector<2x1x8x8xf32>
    %53 = tpu.concatenate %46, %48, %50, %52 in 1 : vector<2x1x8x8xf32>, vector<2x1x8x8xf32>, vector<2x1x8x8xf32>, vector<2x1x8x8xf32> -> vector<2x4x8x8xf32>
    %54 = vector.shape_cast %53 : vector<2x4x8x8xf32> to vector<8x8x8xf32>
    "tpu.trace_start"() <{level = 10 : i32, message = "gqd,gkd->gqk"}> : () -> ()
    %cst_11 = arith.constant dense<0.000000e+00> : vector<8x8x8xf32>
    %55 = tpu.matmul %34, %44, %cst_11 {dimension_numbers = #tpu.dot_dimension_numbers<[2], [2], [1], [1], [0, 0, 0, 1, 1, 1], [0], [0]>} : vector<8x8x8xf32>, vector<8x8x8xf32>, vector<8x8x8xf32> -> vector<8x8x8xf32>
    "tpu.trace_stop"() : () -> ()
    %c0_12 = arith.constant 0 : index
    %c0_13 = arith.constant 0 : index
    %c0_14 = arith.constant 0 : index
    %56 = vector.load %arg2[%c0_12, %c0_13, %c0_14] : memref<2x1x8xf32, #tpu.memory_space<vmem>>, vector<2x1x8xf32>
    %cst_15 = arith.constant 0.000000e+00 : f32
    %57 = vector.broadcast %cst_15 : f32 to vector<2x1x8xf32>
    %58 = arith.cmpf one, %56, %57 : vector<2x1x8xf32>
    %cst_16 = arith.constant 0.000000e+00 : f32
    %cst_17 = arith.constant -1.000000e+09 : f32
    %59 = vector.broadcast %cst_16 : f32 to vector<2x1x8xf32>
    %60 = vector.broadcast %cst_17 : f32 to vector<2x1x8xf32>
    %61 = arith.select %58, %59, %60 : vector<2x1x8xi1>, vector<2x1x8xf32>
    %62 = vector.shape_cast %61 : vector<2x1x8xf32> to vector<2x1x1x8xf32>
    %63 = vector.shape_cast %62 : vector<2x1x1x8xf32> to vector<2x1x1x8xf32>
    %64 = vector.broadcast %63 : vector<2x1x1x8xf32> to vector<2x4x1x8xf32>
    %65 = vector.shape_cast %64 : vector<2x4x1x8xf32> to vector<8x1x8xf32>
    %66 = vector.broadcast %65 : vector<8x1x8xf32> to vector<8x8x8xf32>
    %67 = arith.addf %55, %66 : vector<8x8x8xf32>
    %cst_18 = arith.constant dense<0xFF800000> : vector<8x8xf32>
    %68 = vector.multi_reduction <maximumf>, %67, %cst_18 [2] : vector<8x8x8xf32> to vector<8x8xf32>
    %69 = vector.shape_cast %68 : vector<8x8xf32> to vector<8x8x1xf32>
    %70 = vector.broadcast %69 : vector<8x8x1xf32> to vector<8x8x8xf32>
    %71 = arith.subf %67, %70 : vector<8x8x8xf32>
    %72 = math.exp %71 : vector<8x8x8xf32>
    %cst_19 = arith.constant dense<0.000000e+00> : vector<8x8xf32>
    %73 = vector.multi_reduction <add>, %72, %cst_19 [2] : vector<8x8x8xf32> to vector<8x8xf32>
    %74 = vector.shape_cast %73 : vector<8x8xf32> to vector<8x8x1xf32>
    %75 = vector.broadcast %74 : vector<8x8x1xf32> to vector<8x8x8xf32>
    %76 = arith.divf %72, %75 : vector<8x8x8xf32>
    "tpu.trace_start"() <{level = 10 : i32, message = "gqk,gkd->gqd"}> : () -> ()
    %cst_20 = arith.constant dense<0.000000e+00> : vector<8x8x8xf32>
    %77 = tpu.matmul %76, %54, %cst_20 {dimension_numbers = #tpu.dot_dimension_numbers<[2], [1], [1], [2], [0, 0, 0, 1, 1, 2], [0], [0]>} : vector<8x8x8xf32>, vector<8x8x8xf32>, vector<8x8x8xf32> -> vector<8x8x8xf32>
    "tpu.trace_stop"() : () -> ()
    %78 = vector.shape_cast %77 : vector<8x8x8xf32> to vector<2x4x8x8xf32>
    %79 = vector.extract_strided_slice %78 {offsets = [0, 0, 0, 0], sizes = [2, 1, 8, 8], strides = [1, 1, 1, 1]} : vector<2x4x8x8xf32> to vector<2x1x8x8xf32>
    %80 = vector.shape_cast %79 : vector<2x1x8x8xf32> to vector<2x8x8xf32>
    %81 = vector.extract_strided_slice %78 {offsets = [0, 1, 0, 0], sizes = [2, 1, 8, 8], strides = [1, 1, 1, 1]} : vector<2x4x8x8xf32> to vector<2x1x8x8xf32>
    %82 = vector.shape_cast %81 : vector<2x1x8x8xf32> to vector<2x8x8xf32>
    %83 = vector.extract_strided_slice %78 {offsets = [0, 2, 0, 0], sizes = [2, 1, 8, 8], strides = [1, 1, 1, 1]} : vector<2x4x8x8xf32> to vector<2x1x8x8xf32>
    %84 = vector.shape_cast %83 : vector<2x1x8x8xf32> to vector<2x8x8xf32>
    %85 = vector.extract_strided_slice %78 {offsets = [0, 3, 0, 0], sizes = [2, 1, 8, 8], strides = [1, 1, 1, 1]} : vector<2x4x8x8xf32> to vector<2x1x8x8xf32>
    %86 = vector.shape_cast %85 : vector<2x1x8x8xf32> to vector<2x8x8xf32>
    %87 = tpu.concatenate %80, %82, %84, %86 in 2 : vector<2x8x8xf32>, vector<2x8x8xf32>, vector<2x8x8xf32>, vector<2x8x8xf32> -> vector<2x8x32xf32>
    %88 = vector.shape_cast %87 : vector<2x8x32xf32> to vector<16x32xf32>
    %c0_21 = arith.constant 0 : index
    %c96 = arith.constant 96 : index
    %89 = vector.load %arg3[%c0_21, %c96] : memref<64x224xf32, #tpu.memory_space<vmem>>, vector<32x32xf32>
    %cst_22 = arith.constant dense<0.000000e+00> : vector<16x32xf32>
    %90 = tpu.matmul %88, %89, %cst_22 {dimension_numbers = #tpu.dot_dimension_numbers<[1], [0], [0], [1], [0, 0, 1, 1], [], []>} : vector<16x32xf32>, vector<32x32xf32>, vector<16x32xf32> -> vector<16x32xf32>
    %c0_23 = arith.constant 0 : index
    %c96_24 = arith.constant 96 : index
    %91 = vector.load %arg4[%c0_23, %c96_24] : memref<1x224xf32, #tpu.memory_space<vmem>>, vector<1x32xf32>
    %92 = vector.broadcast %91 : vector<1x32xf32> to vector<16x32xf32>
    %93 = arith.addf %90, %92 : vector<16x32xf32>
    %94 = vector.shape_cast %93 : vector<16x32xf32> to vector<2x8x32xf32>
    %95 = arith.addf %0, %94 : vector<2x8x32xf32>
    %cst_25 = arith.constant dense<0.000000e+00> : vector<2x8xf32>
    %96 = vector.multi_reduction <add>, %95, %cst_25 [2] : vector<2x8x32xf32> to vector<2x8xf32>
    %97 = vector.shape_cast %96 : vector<2x8xf32> to vector<2x8x1xf32>
    %cst_26 = arith.constant 3.200000e+01 : f32
    %98 = vector.broadcast %cst_26 : f32 to vector<2x8x1xf32>
    %99 = arith.divf %97, %98 : vector<2x8x1xf32>
    %100 = vector.broadcast %99 : vector<2x8x1xf32> to vector<2x8x32xf32>
    %101 = arith.subf %95, %100 : vector<2x8x32xf32>
    %102 = arith.mulf %101, %101 : vector<2x8x32xf32>
    %cst_27 = arith.constant dense<0.000000e+00> : vector<2x8xf32>
    %103 = vector.multi_reduction <add>, %102, %cst_27 [2] : vector<2x8x32xf32> to vector<2x8xf32>
    %104 = vector.shape_cast %103 : vector<2x8xf32> to vector<2x8x1xf32>
    %cst_28 = arith.constant 0.0322580636 : f32
    %105 = vector.broadcast %cst_28 : f32 to vector<2x8x1xf32>
    %106 = arith.mulf %104, %105 : vector<2x8x1xf32>
    %107 = vector.broadcast %99 : vector<2x8x1xf32> to vector<2x8x32xf32>
    %108 = arith.subf %95, %107 : vector<2x8x32xf32>
    %109 = math.sqrt %106 : vector<2x8x1xf32>
    %cst_29 = arith.constant 9.99999997E-7 : f32
    %110 = vector.broadcast %cst_29 : f32 to vector<2x8x1xf32>
    %111 = arith.addf %109, %110 : vector<2x8x1xf32>
    %112 = vector.broadcast %111 : vector<2x8x1xf32> to vector<2x8x32xf32>
    %113 = arith.divf %108, %112 : vector<2x8x32xf32>
    %114 = vector.shape_cast %113 : vector<2x8x32xf32> to vector<16x32xf32>
    %c0_30 = arith.constant 0 : index
    %c128 = arith.constant 128 : index
    %115 = vector.load %arg3[%c0_30, %c128] : memref<64x224xf32, #tpu.memory_space<vmem>>, vector<32x64xf32>
    %cst_31 = arith.constant dense<0.000000e+00> : vector<16x64xf32>
    %116 = tpu.matmul %114, %115, %cst_31 {dimension_numbers = #tpu.dot_dimension_numbers<[1], [0], [0], [1], [0, 0, 1, 1], [], []>} : vector<16x32xf32>, vector<32x64xf32>, vector<16x64xf32> -> vector<16x64xf32>
    %c0_32 = arith.constant 0 : index
    %c128_33 = arith.constant 128 : index
    %117 = vector.load %arg4[%c0_32, %c128_33] : memref<1x224xf32, #tpu.memory_space<vmem>>, vector<1x64xf32>
    %118 = vector.broadcast %117 : vector<1x64xf32> to vector<16x64xf32>
    %119 = arith.addf %116, %118 : vector<16x64xf32>
    %cst_34 = arith.constant 0.000000e+00 : f32
    %120 = vector.broadcast %cst_34 : f32 to vector<16x64xf32>
    %121 = arith.maximumf %119, %120 : vector<16x64xf32>
    %c0_35 = arith.constant 0 : index
    %c192 = arith.constant 192 : index
    %122 = vector.load %arg3[%c0_35, %c192] : memref<64x224xf32, #tpu.memory_space<vmem>>, vector<64x32xf32>
    %cst_36 = arith.constant dense<0.000000e+00> : vector<16x32xf32>
    %123 = tpu.matmul %121, %122, %cst_36 {dimension_numbers = #tpu.dot_dimension_numbers<[1], [0], [0], [1], [0, 0, 1, 1], [], []>} : vector<16x64xf32>, vector<64x32xf32>, vector<16x32xf32> -> vector<16x32xf32>
    %c0_37 = arith.constant 0 : index
    %c192_38 = arith.constant 192 : index
    %124 = vector.load %arg4[%c0_37, %c192_38] : memref<1x224xf32, #tpu.memory_space<vmem>>, vector<1x32xf32>
    %125 = vector.broadcast %124 : vector<1x32xf32> to vector<16x32xf32>
    %126 = arith.addf %123, %125 : vector<16x32xf32>
    %127 = vector.shape_cast %126 : vector<16x32xf32> to vector<2x8x32xf32>
    %128 = arith.addf %95, %127 : vector<2x8x32xf32>
    %c0_39 = arith.constant 0 : index
    %c0_40 = arith.constant 0 : index
    %c0_41 = arith.constant 0 : index
    %129 = vector.load %arg5[%c0_39, %c0_40, %c0_41] : memref<2x8x32xf32, #tpu.memory_space<vmem>>, vector<2x8x32xf32>
    tpu.vector_store %arg5[%c0_39, %c0_40, %c0_41], %128 {strides = array<i32>} : memref<2x8x32xf32, #tpu.memory_space<vmem>>, vector<2x8x32xf32>,
    return
  }
  func.func @transform_0(%arg0: i32) -> (i32, i32, i32) {
    %c0_i32 = arith.constant 0 : i32
    %c0_i32_0 = arith.constant 0 : i32
    %c0_i32_1 = arith.constant 0 : i32
    %c0_i32_2 = arith.constant 0 : i32
    return %c0_i32, %c0_i32_0, %c0_i32_1 : i32, i32, i32
  }
  func.func @transform_1(%arg0: i32) -> (i32, i32, i32) {
    %c0_i32 = arith.constant 0 : i32
    %c0_i32_0 = arith.constant 0 : i32
    %c0_i32_1 = arith.constant 0 : i32
    %c0_i32_2 = arith.constant 0 : i32
    return %c0_i32, %c0_i32_0, %c0_i32_1 : i32, i32, i32
  }
  func.func @transform_2(%arg0: i32) -> (i32, i32) {
    %c0_i32 = arith.constant 0 : i32
    %c0_i32_0 = arith.constant 0 : i32
    %c0_i32_1 = arith.constant 0 : i32
    return %c0_i32, %c0_i32_0 : i32, i32
  }
  func.func @transform_3(%arg0: i32) -> (i32, i32) {
    %c0_i32 = arith.constant 0 : i32
    %c0_i32_0 = arith.constant 0 : i32
    %c0_i32_1 = arith.constant 0 : i32
    return %c0_i32, %c0_i32_0 : i32, i32
  }
  func.func @transform_4(%arg0: i32) -> (i32, i32, i32) {
    %c0_i32 = arith.constant 0 : i32
    %c0_i32_0 = arith.constant 0 : i32
    %c0_i32_1 = arith.constant 0 : i32
    %c0_i32_2 = arith.constant 0 : i32
    return %c0_i32, %c0_i32_0, %c0_i32_1 : i32, i32, i32
  }
}

</mosaic_0001>

<llo_original>
// kernel: encoder_layer.1
$region0: #{encoder_layer.1}
  #allocation0 [shape = 'u32[]', space=smem, size = 0x4, offset = 0x4, fixed_abs, tag = 'smem constant byte address 0x4 - core index']
  #allocation1 [shape = 'u32[144,128]{1,0:T(1,128)}', space=vmem, size = 0x12000, scoped, tag = 'internal scratch']
  %s0 = inlined_call_operand.hbm [shape: f32[2,8,32], index: 0, kind: input, shape index: {}]
  %s1 = inlined_call_operand.vmem [shape: f32[2,1,8], index: 1, kind: input, shape index: {}]
  %s2 = inlined_call_operand.hbm [shape: f32[64,224], index: 2, kind: input, shape index: {}]
  %s3 = inlined_call_operand.vmem [shape: f32[1,224], index: 3, kind: input, shape index: {}]
  %s4 = inlined_call_operand.hbm [shape: f32[2,8,32], index: 4, kind: output, shape index: {}]
  %s5 = sld [smem:[#allocation0]]
  $region34: #{encoder_layer.1} parent=0
    _
  %s7 = ssub.s32 1, %s5
  %s8 = scalar_select 0, %s7, %s5
  $region1: #{encoder_layer.1} parent=0
    #allocation2 [shape = 'u8[8192]{0}', space=vmem, size = 0x2000, scoped, tag = 'input window, operand 0, single buffered']
    #allocation3 [shape = 's32[1]{0}', space=sflag, size = 0x4, scoped, tag = 'scoped memory for encoder_layer.1']
    #allocation4 [shape = 's32[1]{0}', space=sflag, size = 0x4, scoped, tag = 'scoped memory for encoder_layer.1']
    #allocation5 [shape = 'u8[65536]{0}', space=vmem, size = 0x10000, scoped, tag = 'input window, operand 2, single buffered']
    #allocation6 [shape = 's32[1]{0}', space=sflag, size = 0x4, scoped, tag = 'scoped memory for encoder_layer.1']
    #allocation7 [shape = 'u8[8192]{0}', space=vmem, size = 0x2000, scoped, tag = 'output window, operand 0, single buffered']
    %9 = vsyncpa [#allocation3], 0
    %10 = vsyncpa [#allocation6], 0
    %11 = vsyncpa [#allocation4], 0
    // Predicated region
    $region2: #{encoder_layer.1} parent=1 // pred_check
      _
    $region3: #{encoder_layer.1} parent=1 // pred_check_branch
      %13 = sbr.rel (0) target = $region5
    $region4: #{encoder_layer.1} parent=1 // pred_region
      %s15 = ssub.s32 256, 256
      %16 = vsyncadd [#allocation3], %s15
      %s17 = sshll.u32 [#allocation2], 4
      %s18 = int_to_ptr.vmem [resolvable:$true] %s17
      %23 = dma.hbm_to_vmem [thread:$0]  %s0, 256, %s18, [#allocation3], 128, 128, 8
    $region5: #{encoder_layer.1} parent=1 // pred_fallthru
      _
    // Predicated region
    $region6: #{encoder_layer.1} parent=1 // pred_check
      _
    $region7: #{encoder_layer.1} parent=1 // pred_check_branch
      %25 = sbr.rel (0) target = $region9
    $region8: #{encoder_layer.1} parent=1 // pred_region
      _
    $region9: #{encoder_layer.1} parent=1 // pred_fallthru
      _
    // Predicated region
    $region10: #{encoder_layer.1} parent=1 // pred_check
      _
    $region11: #{encoder_layer.1} parent=1 // pred_check_branch
      %27 = sbr.rel (0) target = $region13
    $region12: #{encoder_layer.1} parent=1 // pred_region
      %s29 = ssub.s32 2048, 2048
      %30 = vsyncadd [#allocation6], %s29
      %s31 = sshll.u32 [#allocation5], 4
      %s32 = int_to_ptr.vmem [resolvable:$true] %s31
      %37 = dma.hbm_to_vmem [thread:$0]  %s2, 2048, %s32, [#allocation6], 256, 256, 16
    $region13: #{encoder_layer.1} parent=1 // pred_fallthru
      _
    // Predicated region
    $region14: #{encoder_layer.1} parent=1 // pred_check
      _
    $region15: #{encoder_layer.1} parent=1 // pred_check_branch
      %39 = sbr.rel (0) target = $region17
    $region16: #{encoder_layer.1} parent=1 // pred_region
      _
    $region17: #{encoder_layer.1} parent=1 // pred_fallthru
      _
    // Predicated region
    $region18: #{encoder_layer.1} parent=1 // pred_check
      _
    $region19: #{encoder_layer.1} parent=1 // pred_check_branch
      %41 = sbr.rel (0) target = $region21
    $region20: #{encoder_layer.1} parent=1 // pred_region
      %42 = dma.done [#allocation3], 256
    $region21: #{encoder_layer.1} parent=1 // pred_fallthru
      _
    // Predicated region
    $region22: #{encoder_layer.1} parent=1 // pred_check
      _
    $region23: #{encoder_layer.1} parent=1 // pred_check_branch
      %44 = sbr.rel (0) target = $region25
    $region24: #{encoder_layer.1} parent=1 // pred_region
      %45 = dma.done [#allocation6], 2048
    $region25: #{encoder_layer.1} parent=1 // pred_fallthru
      _
    %v46 = vld [vmem:[#allocation2] sm:$0xff]
    %v47 = vld [vmem:[#allocation2 + $0x8] sm:$0xff]
    %vm48 = vcmask 261120
    %v49 = vsel %vm48, %v46, 0.0
    %50 = vadd.xlane.f32.xlu0 %v49
    %v51 = vpop.xlane.xlu0 %50
    %v52 = vsel %vm48, %v47, 0.0
    %53 = vadd.xlane.f32.xlu0 %v52
    %v54 = vpop.xlane.xlu0 %53
    %v55 = vrcp.pop 32.0
    %v56 = vmul.f32 %v51, %v55
    %v57 = vmul.f32 %v54, %v55
    %v58 = vsub.f32 %v46, %v56
    %v59 = vsub.f32 %v47, %v57
    %v60 = vmul.f32 %v58, %v58
    %v61 = vmul.f32 %v59, %v59
    %v62 = vsel %vm48, %v60, 0.0
    %63 = vadd.xlane.f32.xlu0 %v62
    %v64 = vpop.xlane.xlu0 %63
    %v65 = vsel %vm48, %v61, 0.0
    %66 = vadd.xlane.f32.xlu0 %v65
    %v67 = vpop.xlane.xlu0 %66
    %v68 = vmul.f32 %v64, 0.032258064
    %v69 = vmul.f32 %v67, 0.032258064
    %v70 = vrsqrt.pop %v68
    %v71 = vmul.f32 %v68, %v70
    %vm72 = vcmp.eq.f32.partialorder %v68, inf
    %v73 = vsel %vm72, %v68, %v71
    %vm74 = vcmp.eq.f32.partialorder %v68, 0.0
    %v75 = vand.u32 %v68, 2147483648
    %v76 = vsel %vm74, %v75, %v73
    %v77 = vrsqrt.pop %v69
    %v78 = vmul.f32 %v69, %v77
    %vm79 = vcmp.eq.f32.partialorder %v69, inf
    %v80 = vsel %vm79, %v69, %v78
    %vm81 = vcmp.eq.f32.partialorder %v69, 0.0
    %v82 = vand.u32 %v69, 2147483648
    %v83 = vsel %vm81, %v82, %v80
    %v84 = vadd.f32 %v76, 1e-06
    %v85 = vadd.f32 %v83, 1e-06
    %v86 = vrcp.pop %v84
    %v87 = vmul.f32 %v58, %v86
    %v88 = vrcp.pop %v85
    %v89 = vmul.f32 %v59, %v88
    %v90 = vld [vmem:[#allocation5] sm:$0xff]
    %v91 = vld [vmem:[#allocation5 + $0x10] sm:$0xff]
    %v92 = vld [vmem:[#allocation5 + $0x20] sm:$0xff]
    %v93 = vld [vmem:[#allocation5 + $0x30] sm:$0xff]
    %v94 = vld [vmem:[%s3] sm:$0x1]
    %v96 = vlaneseq
    %v97 = vshrl.u32 %v96, 7
    %v98 = vsub.s32 0, %v97
    %v99 = vrot.slane %v94, %v98
    %v102 = vsel %vm48, %v87, 0
    %v105 = vsel %vm48, %v89, 0
    %107 = vmatprep.subr.mxu0 0.0
    %108 = vmatpush1.msra.mxu0 %v90
    %109 = vmatprep.subr.mxu0 0.0
    %110 = vmatpush1.msra.mxu0 %v91
    %111 = vmatprep.subr.mxu0 0.0
    %112 = vmatpush1.msra.mxu0 %v92
    %113 = vmatprep.subr.mxu0 0.0
    %114 = vmatpush1.msra.mxu0 %v93
    %115 = vmatprep.subr.mxu0 0.0
    %116 = vmatpush1.msra.mxu0 0.0
    %117 = vmatprep.subr.mxu0 0.0
    %118 = vmatpush1.msra.mxu0 0.0
    %119 = vmatprep.subr.mxu0 0.0
    %120 = vmatpush1.msra.mxu0 0.0
    %121 = vmatprep.subr.mxu0 0.0
    %122 = vmatpush1.msra.mxu0 0.0
    %123 = vmatprep.subr.mxu0 0.0
    %124 = vmatpush1.msra.mxu0 0.0
    %125 = vmatprep.subr.mxu0 0.0
    %126 = vmatpush1.msra.mxu0 0.0
    %127 = vmatprep.subr.mxu0 0.0
    %128 = vmatpush1.msra.mxu0 0.0
    %129 = vmatprep.subr.mxu0 0.0
    %130 = vmatpush1.msra.mxu0 0.0
    %131 = vmatprep.subr.mxu0 0.0
    %132 = vmatpush1.msra.mxu0 0.0
    %133 = vmatprep.subr.mxu0 0.0
    %134 = vmatpush1.msra.mxu0 0.0
    %135 = vmatprep.subr.mxu0 0.0
    %136 = vmatpush1.msra.mxu0 0.0
    %137 = vmatprep.subr.mxu0 0.0
    %138 = vmatpush1.msra.mxu0 0.0
    %139 = vmatprep.subr.mxu0 0.0
    %140 = vmatpush1.msra.mxu0 0.0
    %141 = vmatprep.subr.mxu0 0.0
    %142 = vmatpush1.msra.mxu0 0.0
    %143 = vmatprep.subr.mxu0 0.0
    %144 = vmatpush1.msra.mxu0 0.0
    %145 = vmatprep.subr.mxu0 0.0
    %146 = vmatpush1.msra.mxu0 0.0
    %147 = vmatprep.subr.mxu0 0.0
    %148 = vmatpush1.msra.mxu0 0.0
    %149 = vmatprep.subr.mxu0 0.0
    %150 = vmatpush1.msra.mxu0 0.0
    %151 = vmatprep.subr.mxu0 0.0
    %152 = vmatpush1.msra.mxu0 0.0
    %153 = vmatprep.subr.mxu0 0.0
    %154 = vmatpush1.msra.mxu0 0.0
    %155 = vmatprep.subr.mxu0 0.0
    %156 = vmatpush1.msra.mxu0 0.0
    %157 = vmatprep.subr.mxu0 0.0
    %158 = vmatpush1.msra.mxu0 0.0
    %159 = vmatprep.subr.mxu0 0.0
    %160 = vmatpush1.msra.mxu0 0.0
    %161 = vmatprep.subr.mxu0 0.0
    %162 = vmatpush1.msra.mxu0 0.0
    %163 = vmatprep.subr.mxu0 0.0
    %164 = vmatpush1.msra.mxu0 0.0
    %165 = vmatprep.subr.mxu0 0.0
    %166 = vmatpush1.msra.mxu0 0.0
    %167 = vmatprep.subr.mxu0 0.0
    %168 = vmatpush1.msra.mxu0 0.0
    %169 = vmatprep.subr.mxu0 0.0
    %170 = vmatpush1.msra.mxu0 0.0
    %171 = vmatprep.mubr.f32.mxu0 0.0
    %172 = vmatmul.mubr.f32.gmra.mrb[0].mxu0 %v102
    %v173 = vpop.f32.mrb[0].mxu0
    %v174 = vadd.f32 %v99, %v173
    %v175 = vpop.f32.mrb[0].mxu0
    %176 = vmatprep.mubr.f32.mxu0 0.0
    %177 = vmatmul.mubr.f32.gmra.mrb[0].mxu0 %v105
    %v178 = vpop.f32.mrb[0].mxu0
    %v179 = vadd.f32 %v99, %v178
    %v180 = vpop.f32.mrb[0].mxu0
    %181 = vdwg.mxu0
    %184 = vrot.lane.b32.xlu0 %v174, 120
    %v185 = vpop.permute.xlu0 %184
    %186 = vrot.lane.b32.xlu0 %v179, 120
    %v187 = vpop.permute.xlu0 %186
    %188 = vrot.lane.b32.xlu0 %v174, 112
    %v189 = vpop.permute.xlu0 %188
    %190 = vrot.lane.b32.xlu0 %v179, 112
    %v191 = vpop.permute.xlu0 %190
    %192 = vrot.lane.b32.xlu0 %v174, 104
    %v193 = vpop.permute.xlu0 %192
    %194 = vrot.lane.b32.xlu0 %v179, 104
    %v195 = vpop.permute.xlu0 %194
    %v196 = vld [vmem:[%s1] sm:$0x1]
    %v197 = vld [vmem:[%s1 + $0x1] sm:$0x1]
    %vm198 = vcmp.ne.f32.partialorder %v196, 0.0
    %vm199 = vcmp.ne.f32.partialorder %v197, 0.0
    %v200 = vsel %vm198, 0.0, -1e+09
    %v201 = vsel %vm199, 0.0, -1e+09
    %v204 = vlaneseq
    %v205 = vshrl.u32 %v204, 7
    %v206 = vsub.s32 0, %v205
    %v207 = vrot.slane %v200, %v206
    %v208 = vlaneseq
    %v209 = vshrl.u32 %v208, 7
    %v210 = vsub.s32 0, %v209
    %v211 = vrot.slane %v201, %v210
    %214 = vrot.lane.b32.xlu0 %v174, 96
    %v215 = vpop.permute.xlu0 %214
    %vm216 = vcmask 64512
    %v217 = vsel %vm216, %v174, 0
    %v219 = vsel %vm216, %v215, 0
    %221 = vmatprep.subr.mxu0 0.0
    %222 = vmatpush1.xpose.msra.mxu0 %v219
    %223 = vmatprep.subr.mxu0 0.0
    %224 = vmatpush1.xpose.msra.mxu0 0.0
    %225 = vmatprep.subr.mxu0 0.0
    %226 = vmatpush1.xpose.msra.mxu0 0.0
    %227 = vmatprep.subr.mxu0 0.0
    %228 = vmatpush1.xpose.msra.mxu0 0.0
    %229 = vmatprep.subr.mxu0 0.0
    %230 = vmatpush1.xpose.msra.mxu0 0.0
    %231 = vmatprep.subr.mxu0 0.0
    %232 = vmatpush1.xpose.msra.mxu0 0.0
    %233 = vmatprep.subr.mxu0 0.0
    %234 = vmatpush1.xpose.msra.mxu0 0.0
    %235 = vmatprep.subr.mxu0 0.0
    %236 = vmatpush1.xpose.msra.mxu0 0.0
    %237 = vmatprep.subr.mxu0 0.0
    %238 = vmatpush1.xpose.msra.mxu0 0.0
    %239 = vmatprep.subr.mxu0 0.0
    %240 = vmatpush1.xpose.msra.mxu0 0.0
    %241 = vmatprep.subr.mxu0 0.0
    %242 = vmatpush1.xpose.msra.mxu0 0.0
    %243 = vmatprep.subr.mxu0 0.0
    %244 = vmatpush1.xpose.msra.mxu0 0.0
    %245 = vmatprep.subr.mxu0 0.0
    %246 = vmatpush1.xpose.msra.mxu0 0.0
    %247 = vmatprep.subr.mxu0 0.0
    %248 = vmatpush1.xpose.msra.mxu0 0.0
    %249 = vmatprep.subr.mxu0 0.0
    %250 = vmatpush1.xpose.msra.mxu0 0.0
    %251 = vmatprep.subr.mxu0 0.0
    %252 = vmatpush1.xpose.msra.mxu0 0.0
    %253 = vmatprep.subr.mxu0 0.0
    %254 = vmatpush1.xpose.msra.mxu0 0.0
    %255 = vmatprep.subr.mxu0 0.0
    %256 = vmatpush1.xpose.msra.mxu0 0.0
    %257 = vmatprep.subr.mxu0 0.0
    %258 = vmatpush1.xpose.msra.mxu0 0.0
    %259 = vmatprep.subr.mxu0 0.0
    %260 = vmatpush1.xpose.msra.mxu0 0.0
    %261 = vmatprep.subr.mxu0 0.0
    %262 = vmatpush1.xpose.msra.mxu0 0.0
    %263 = vmatprep.subr.mxu0 0.0
    %264 = vmatpush1.xpose.msra.mxu0 0.0
    %265 = vmatprep.subr.mxu0 0.0
    %266 = vmatpush1.xpose.msra.mxu0 0.0
    %267 = vmatprep.subr.mxu0 0.0
    %268 = vmatpush1.xpose.msra.mxu0 0.0
    %269 = vmatprep.subr.mxu0 0.0
    %270 = vmatpush1.xpose.msra.mxu0 0.0
    %271 = vmatprep.subr.mxu0 0.0
    %272 = vmatpush1.xpose.msra.mxu0 0.0
    %273 = vmatprep.subr.mxu0 0.0
    %274 = vmatpush1.xpose.msra.mxu0 0.0
    %275 = vmatprep.subr.mxu0 0.0
    %276 = vmatpush1.xpose.msra.mxu0 0.0
    %277 = vmatprep.subr.mxu0 0.0
    %278 = vmatpush1.xpose.msra.mxu0 0.0
    %279 = vmatprep.subr.mxu0 0.0
    %280 = vmatpush1.xpose.msra.mxu0 0.0
    %281 = vmatprep.subr.mxu0 0.0
    %282 = vmatpush1.xpose.msra.mxu0 0.0
    %283 = vmatprep.subr.mxu0 0.0
    %284 = vmatpush1.xpose.msra.mxu0 0.0
    %285 = vmatprep.mubr.f32.mxu0 0.0
    %286 = vmatmul.mubr.f32.gmra.mrb[0].mxu0 %v217
    %v287 = vpop.f32.mrb[0].mxu0
    %v288 = vadd.f32 %v207, %v287
    %v289 = vpop.f32.mrb[0].mxu0
    %290 = vdwg.mxu0
    %291 = vrot.lane.b32.xlu0 %v185, 96
    %v292 = vpop.permute.xlu0 %291
    %v293 = vsel %vm216, %v185, 0
    %v295 = vsel %vm216, %v292, 0
    %297 = vmatprep.subr.mxu0 0.0
    %298 = vmatpush1.xpose.msra.mxu0 %v295
    %299 = vmatprep.subr.mxu0 0.0
    %300 = vmatpush1.xpose.msra.mxu0 0.0
    %301 = vmatprep.subr.mxu0 0.0
    %302 = vmatpush1.xpose.msra.mxu0 0.0
    %303 = vmatprep.subr.mxu0 0.0
    %304 = vmatpush1.xpose.msra.mxu0 0.0
    %305 = vmatprep.subr.mxu0 0.0
    %306 = vmatpush1.xpose.msra.mxu0 0.0
    %307 = vmatprep.subr.mxu0 0.0
    %308 = vmatpush1.xpose.msra.mxu0 0.0
    %309 = vmatprep.subr.mxu0 0.0
    %310 = vmatpush1.xpose.msra.mxu0 0.0
    %311 = vmatprep.subr.mxu0 0.0
    %312 = vmatpush1.xpose.msra.mxu0 0.0
    %313 = vmatprep.subr.mxu0 0.0
    %314 = vmatpush1.xpose.msra.mxu0 0.0
    %315 = vmatprep.subr.mxu0 0.0
    %316 = vmatpush1.xpose.msra.mxu0 0.0
    %317 = vmatprep.subr.mxu0 0.0
    %318 = vmatpush1.xpose.msra.mxu0 0.0
    %319 = vmatprep.subr.mxu0 0.0
    %320 = vmatpush1.xpose.msra.mxu0 0.0
    %321 = vmatprep.subr.mxu0 0.0
    %322 = vmatpush1.xpose.msra.mxu0 0.0
    %323 = vmatprep.subr.mxu0 0.0
    %324 = vmatpush1.xpose.msra.mxu0 0.0
    %325 = vmatprep.subr.mxu0 0.0
    %326 = vmatpush1.xpose.msra.mxu0 0.0
    %327 = vmatprep.subr.mxu0 0.0
    %328 = vmatpush1.xpose.msra.mxu0 0.0
    %329 = vmatprep.subr.mxu0 0.0
    %330 = vmatpush1.xpose.msra.mxu0 0.0
    %331 = vmatprep.subr.mxu0 0.0
    %332 = vmatpush1.xpose.msra.mxu0 0.0
    %333 = vmatprep.subr.mxu0 0.0
    %334 = vmatpush1.xpose.msra.mxu0 0.0
    %335 = vmatprep.subr.mxu0 0.0
    %336 = vmatpush1.xpose.msra.mxu0 0.0
    %337 = vmatprep.subr.mxu0 0.0
    %338 = vmatpush1.xpose.msra.mxu0 0.0
    %339 = vmatprep.subr.mxu0 0.0
    %340 = vmatpush1.xpose.msra.mxu0 0.0
    %341 = vmatprep.subr.mxu0 0.0
    %342 = vmatpush1.xpose.msra.mxu0 0.0
    %343 = vmatprep.subr.mxu0 0.0
    %344 = vmatpush1.xpose.msra.mxu0 0.0
    %345 = vmatprep.subr.mxu0 0.0
    %346 = vmatpush1.xpose.msra.mxu0 0.0
    %347 = vmatprep.subr.mxu0 0.0
    %348 = vmatpush1.xpose.msra.mxu0 0.0
    %349 = vmatprep.subr.mxu0 0.0
    %350 = vmatpush1.xpose.msra.mxu0 0.0
    %351 = vmatprep.subr.mxu0 0.0
    %352 = vmatpush1.xpose.msra.mxu0 0.0
    %353 = vmatprep.subr.mxu0 0.0
    %354 = vmatpush1.xpose.msra.mxu0 0.0
    %355 = vmatprep.subr.mxu0 0.0
    %356 = vmatpush1.xpose.msra.mxu0 0.0
    %357 = vmatprep.subr.mxu0 0.0
    %358 = vmatpush1.xpose.msra.mxu0 0.0
    %359 = vmatprep.subr.mxu0 0.0
    %360 = vmatpush1.xpose.msra.mxu0 0.0
    %361 = vmatprep.mubr.f32.mxu0 0.0
    %362 = vmatmul.mubr.f32.gmra.mrb[0].mxu0 %v293
    %v363 = vpop.f32.mrb[0].mxu0
    %v364 = vadd.f32 %v207, %v363
    %v365 = vpop.f32.mrb[0].mxu0
    %366 = vdwg.mxu0
    %367 = vrot.lane.b32.xlu0 %v189, 96
    %v368 = vpop.permute.xlu0 %367
    %v369 = vsel %vm216, %v189, 0
    %v371 = vsel %vm216, %v368, 0
    %373 = vmatprep.subr.mxu0 0.0
    %374 = vmatpush1.xpose.msra.mxu0 %v371
    %375 = vmatprep.subr.mxu0 0.0
    %376 = vmatpush1.xpose.msra.mxu0 0.0
    %377 = vmatprep.subr.mxu0 0.0
    %378 = vmatpush1.xpose.msra.mxu0 0.0
    %379 = vmatprep.subr.mxu0 0.0
    %380 = vmatpush1.xpose.msra.mxu0 0.0
    %381 = vmatprep.subr.mxu0 0.0
    %382 = vmatpush1.xpose.msra.mxu0 0.0
    %383 = vmatprep.subr.mxu0 0.0
    %384 = vmatpush1.xpose.msra.mxu0 0.0
    %385 = vmatprep.subr.mxu0 0.0
    %386 = vmatpush1.xpose.msra.mxu0 0.0
    %387 = vmatprep.subr.mxu0 0.0
    %388 = vmatpush1.xpose.msra.mxu0 0.0
    %389 = vmatprep.subr.mxu0 0.0
    %390 = vmatpush1.xpose.msra.mxu0 0.0
    %391 = vmatprep.subr.mxu0 0.0
    %392 = vmatpush1.xpose.msra.mxu0 0.0
    %393 = vmatprep.subr.mxu0 0.0
    %394 = vmatpush1.xpose.msra.mxu0 0.0
    %395 = vmatprep.subr.mxu0 0.0
    %396 = vmatpush1.xpose.msra.mxu0 0.0
    %397 = vmatprep.subr.mxu0 0.0
    %398 = vmatpush1.xpose.msra.mxu0 0.0
    %399 = vmatprep.subr.mxu0 0.0
    %400 = vmatpush1.xpose.msra.mxu0 0.0
    %401 = vmatprep.subr.mxu0 0.0
    %402 = vmatpush1.xpose.msra.mxu0 0.0
    %403 = vmatprep.subr.mxu0 0.0
    %404 = vmatpush1.xpose.msra.mxu0 0.0
    %405 = vmatprep.subr.mxu0 0.0
    %406 = vmatpush1.xpose.msra.mxu0 0.0
    %407 = vmatprep.subr.mxu0 0.0
    %408 = vmatpush1.xpose.msra.mxu0 0.0
    %409 = vmatprep.subr.mxu0 0.0
    %410 = vmatpush1.xpose.msra.mxu0 0.0
    %411 = vmatprep.subr.mxu0 0.0
    %412 = vmatpush1.xpose.msra.mxu0 0.0
    %413 = vmatprep.subr.mxu0 0.0
    %414 = vmatpush1.xpose.msra.mxu0 0.0
    %415 = vmatprep.subr.mxu0 0.0
    %416 = vmatpush1.xpose.msra.mxu0 0.0
    %417 = vmatprep.subr.mxu0 0.0
    %418 = vmatpush1.xpose.msra.mxu0 0.0
    %419 = vmatprep.subr.mxu0 0.0
    %420 = vmatpush1.xpose.msra.mxu0 0.0
    %421 = vmatprep.subr.mxu0 0.0
    %422 = vmatpush1.xpose.msra.mxu0 0.0
    %423 = vmatprep.subr.mxu0 0.0
    %424 = vmatpush1.xpose.msra.mxu0 0.0
    %425 = vmatprep.subr.mxu0 0.0
    %426 = vmatpush1.xpose.msra.mxu0 0.0
    %427 = vmatprep.subr.mxu0 0.0
    %428 = vmatpush1.xpose.msra.mxu0 0.0
    %429 = vmatprep.subr.mxu0 0.0
    %430 = vmatpush1.xpose.msra.mxu0 0.0
    %431 = vmatprep.subr.mxu0 0.0
    %432 = vmatpush1.xpose.msra.mxu0 0.0
    %433 = vmatprep.subr.mxu0 0.0
    %434 = vmatpush1.xpose.msra.mxu0 0.0
    %435 = vmatprep.subr.mxu0 0.0
    %436 = vmatpush1.xpose.msra.mxu0 0.0
    %437 = vmatprep.mubr.f32.mxu0 0.0
    %438 = vmatmul.mubr.f32.gmra.mrb[0].mxu0 %v369
    %v439 = vpop.f32.mrb[0].mxu0
    %v440 = vadd.f32 %v207, %v439
    %v441 = vpop.f32.mrb[0].mxu0
    %442 = vdwg.mxu0
    %443 = vrot.lane.b32.xlu0 %v193, 96
    %v444 = vpop.permute.xlu0 %443
    %v445 = vsel %vm216, %v193, 0
    %v447 = vsel %vm216, %v444, 0
    %449 = vmatprep.subr.mxu0 0.0
    %450 = vmatpush1.xpose.msra.mxu0 %v447
    %451 = vmatprep.subr.mxu0 0.0
    %452 = vmatpush1.xpose.msra.mxu0 0.0
    %453 = vmatprep.subr.mxu0 0.0
    %454 = vmatpush1.xpose.msra.mxu0 0.0
    %455 = vmatprep.subr.mxu0 0.0
    %456 = vmatpush1.xpose.msra.mxu0 0.0
    %457 = vmatprep.subr.mxu0 0.0
    %458 = vmatpush1.xpose.msra.mxu0 0.0
    %459 = vmatprep.subr.mxu0 0.0
    %460 = vmatpush1.xpose.msra.mxu0 0.0
    %461 = vmatprep.subr.mxu0 0.0
    %462 = vmatpush1.xpose.msra.mxu0 0.0
    %463 = vmatprep.subr.mxu0 0.0
    %464 = vmatpush1.xpose.msra.mxu0 0.0
    %465 = vmatprep.subr.mxu0 0.0
    %466 = vmatpush1.xpose.msra.mxu0 0.0
    %467 = vmatprep.subr.mxu0 0.0
    %468 = vmatpush1.xpose.msra.mxu0 0.0
    %469 = vmatprep.subr.mxu0 0.0
    %470 = vmatpush1.xpose.msra.mxu0 0.0
    %471 = vmatprep.subr.mxu0 0.0
    %472 = vmatpush1.xpose.msra.mxu0 0.0
    %473 = vmatprep.subr.mxu0 0.0
    %474 = vmatpush1.xpose.msra.mxu0 0.0
    %475 = vmatprep.subr.mxu0 0.0
    %476 = vmatpush1.xpose.msra.mxu0 0.0
    %477 = vmatprep.subr.mxu0 0.0
    %478 = vmatpush1.xpose.msra.mxu0 0.0
    %479 = vmatprep.subr.mxu0 0.0
    %480 = vmatpush1.xpose.msra.mxu0 0.0
    %481 = vmatprep.subr.mxu0 0.0
    %482 = vmatpush1.xpose.msra.mxu0 0.0
    %483 = vmatprep.subr.mxu0 0.0
    %484 = vmatpush1.xpose.msra.mxu0 0.0
    %485 = vmatprep.subr.mxu0 0.0
    %486 = vmatpush1.xpose.msra.mxu0 0.0
    %487 = vmatprep.subr.mxu0 0.0
    %488 = vmatpush1.xpose.msra.mxu0 0.0
    %489 = vmatprep.subr.mxu0 0.0
    %490 = vmatpush1.xpose.msra.mxu0 0.0
    %491 = vmatprep.subr.mxu0 0.0
    %492 = vmatpush1.xpose.msra.mxu0 0.0
    %493 = vmatprep.subr.mxu0 0.0
    %494 = vmatpush1.xpose.msra.mxu0 0.0
    %495 = vmatprep.subr.mxu0 0.0
    %496 = vmatpush1.xpose.msra.mxu0 0.0
    %497 = vmatprep.subr.mxu0 0.0
    %498 = vmatpush1.xpose.msra.mxu0 0.0
    %499 = vmatprep.subr.mxu0 0.0
    %500 = vmatpush1.xpose.msra.mxu0 0.0
    %501 = vmatprep.subr.mxu0 0.0
    %502 = vmatpush1.xpose.msra.mxu0 0.0
    %503 = vmatprep.subr.mxu0 0.0
    %504 = vmatpush1.xpose.msra.mxu0 0.0
    %505 = vmatprep.subr.mxu0 0.0
    %506 = vmatpush1.xpose.msra.mxu0 0.0
    %507 = vmatprep.subr.mxu0 0.0
    %508 = vmatpush1.xpose.msra.mxu0 0.0
    %509 = vmatprep.subr.mxu0 0.0
    %510 = vmatpush1.xpose.msra.mxu0 0.0
    %511 = vmatprep.subr.mxu0 0.0
    %512 = vmatpush1.xpose.msra.mxu0 0.0
    %513 = vmatprep.mubr.f32.mxu0 0.0
    %514 = vmatmul.mubr.f32.gmra.mrb[0].mxu0 %v445
    %v515 = vpop.f32.mrb[0].mxu0
    %v516 = vadd.f32 %v207, %v515
    %v517 = vpop.f32.mrb[0].mxu0
    %518 = vdwg.mxu0
    %519 = vrot.lane.b32.xlu0 %v179, 96
    %v520 = vpop.permute.xlu0 %519
    %v521 = vsel %vm216, %v179, 0
    %v523 = vsel %vm216, %v520, 0
    %525 = vmatprep.subr.mxu0 0.0
    %526 = vmatpush1.xpose.msra.mxu0 %v523
    %527 = vmatprep.subr.mxu0 0.0
    %528 = vmatpush1.xpose.msra.mxu0 0.0
    %529 = vmatprep.subr.mxu0 0.0
    %530 = vmatpush1.xpose.msra.mxu0 0.0
    %531 = vmatprep.subr.mxu0 0.0
    %532 = vmatpush1.xpose.msra.mxu0 0.0
    %533 = vmatprep.subr.mxu0 0.0
    %534 = vmatpush1.xpose.msra.mxu0 0.0
    %535 = vmatprep.subr.mxu0 0.0
    %536 = vmatpush1.xpose.msra.mxu0 0.0
    %537 = vmatprep.subr.mxu0 0.0
    %538 = vmatpush1.xpose.msra.mxu0 0.0
    %539 = vmatprep.subr.mxu0 0.0
    %540 = vmatpush1.xpose.msra.mxu0 0.0
    %541 = vmatprep.subr.mxu0 0.0
    %542 = vmatpush1.xpose.msra.mxu0 0.0
    %543 = vmatprep.subr.mxu0 0.0
    %544 = vmatpush1.xpose.msra.mxu0 0.0
    %545 = vmatprep.subr.mxu0 0.0
    %546 = vmatpush1.xpose.msra.mxu0 0.0
    %547 = vmatprep.subr.mxu0 0.0
    %548 = vmatpush1.xpose.msra.mxu0 0.0
    %549 = vmatprep.subr.mxu0 0.0
    %550 = vmatpush1.xpose.msra.mxu0 0.0
    %551 = vmatprep.subr.mxu0 0.0
    %552 = vmatpush1.xpose.msra.mxu0 0.0
    %553 = vmatprep.subr.mxu0 0.0
    %554 = vmatpush1.xpose.msra.mxu0 0.0
    %555 = vmatprep.subr.mxu0 0.0
    %556 = vmatpush1.xpose.msra.mxu0 0.0
    %557 = vmatprep.subr.mxu0 0.0
    %558 = vmatpush1.xpose.msra.mxu0 0.0
    %559 = vmatprep.subr.mxu0 0.0
    %560 = vmatpush1.xpose.msra.mxu0 0.0
    %561 = vmatprep.subr.mxu0 0.0
    %562 = vmatpush1.xpose.msra.mxu0 0.0
    %563 = vmatprep.subr.mxu0 0.0
    %564 = vmatpush1.xpose.msra.mxu0 0.0
    %565 = vmatprep.subr.mxu0 0.0
    %566 = vmatpush1.xpose.msra.mxu0 0.0
    %567 = vmatprep.subr.mxu0 0.0
    %568 = vmatpush1.xpose.msra.mxu0 0.0
    %569 = vmatprep.subr.mxu0 0.0
    %570 = vmatpush1.xpose.msra.mxu0 0.0
    %571 = vmatprep.subr.mxu0 0.0
    %572 = vmatpush1.xpose.msra.mxu0 0.0
    %573 = vmatprep.subr.mxu0 0.0
    %574 = vmatpush1.xpose.msra.mxu0 0.0
    %575 = vmatprep.subr.mxu0 0.0
    %576 = vmatpush1.xpose.msra.mxu0 0.0
    %577 = vmatprep.subr.mxu0 0.0
    %578 = vmatpush1.xpose.msra.mxu0 0.0
    %579 = vmatprep.subr.mxu0 0.0
    %580 = vmatpush1.xpose.msra.mxu0 0.0
    %581 = vmatprep.subr.mxu0 0.0
    %582 = vmatpush1.xpose.msra.mxu0 0.0
    %583 = vmatprep.subr.mxu0 0.0
    %584 = vmatpush1.xpose.msra.mxu0 0.0
    %585 = vmatprep.subr.mxu0 0.0
    %586 = vmatpush1.xpose.msra.mxu0 0.0
    %587 = vmatprep.subr.mxu0 0.0
    %588 = vmatpush1.xpose.msra.mxu0 0.0
    %589 = vmatprep.mubr.f32.mxu0 0.0
    %590 = vmatmul.mubr.f32.gmra.mrb[0].mxu0 %v521
    %v591 = vpop.f32.mrb[0].mxu0
    %v592 = vadd.f32 %v211, %v591
    %v593 = vpop.f32.mrb[0].mxu0
    %594 = vdwg.mxu0
    %595 = vrot.lane.b32.xlu0 %v187, 96
    %v596 = vpop.permute.xlu0 %595
    %v597 = vsel %vm216, %v187, 0
    %v599 = vsel %vm216, %v596, 0
    %601 = vmatprep.subr.mxu0 0.0
    %602 = vmatpush1.xpose.msra.mxu0 %v599
    %603 = vmatprep.subr.mxu0 0.0
    %604 = vmatpush1.xpose.msra.mxu0 0.0
    %605 = vmatprep.subr.mxu0 0.0
    %606 = vmatpush1.xpose.msra.mxu0 0.0
    %607 = vmatprep.subr.mxu0 0.0
    %608 = vmatpush1.xpose.msra.mxu0 0.0
    %609 = vmatprep.subr.mxu0 0.0
    %610 = vmatpush1.xpose.msra.mxu0 0.0
    %611 = vmatprep.subr.mxu0 0.0
    %612 = vmatpush1.xpose.msra.mxu0 0.0
    %613 = vmatprep.subr.mxu0 0.0
    %614 = vmatpush1.xpose.msra.mxu0 0.0
    %615 = vmatprep.subr.mxu0 0.0
    %616 = vmatpush1.xpose.msra.mxu0 0.0
    %617 = vmatprep.subr.mxu0 0.0
    %618 = vmatpush1.xpose.msra.mxu0 0.0
    %619 = vmatprep.subr.mxu0 0.0
    %620 = vmatpush1.xpose.msra.mxu0 0.0
    %621 = vmatprep.subr.mxu0 0.0
    %622 = vmatpush1.xpose.msra.mxu0 0.0
    %623 = vmatprep.subr.mxu0 0.0
    %624 = vmatpush1.xpose.msra.mxu0 0.0
    %625 = vmatprep.subr.mxu0 0.0
    %626 = vmatpush1.xpose.msra.mxu0 0.0
    %627 = vmatprep.subr.mxu0 0.0
    %628 = vmatpush1.xpose.msra.mxu0 0.0
    %629 = vmatprep.subr.mxu0 0.0
    %630 = vmatpush1.xpose.msra.mxu0 0.0
    %631 = vmatprep.subr.mxu0 0.0
    %632 = vmatpush1.xpose.msra.mxu0 0.0
    %633 = vmatprep.subr.mxu0 0.0
    %634 = vmatpush1.xpose.msra.mxu0 0.0
    %635 = vmatprep.subr.mxu0 0.0
    %636 = vmatpush1.xpose.msra.mxu0 0.0
    %637 = vmatprep.subr.mxu0 0.0
    %638 = vmatpush1.xpose.msra.mxu0 0.0
    %639 = vmatprep.subr.mxu0 0.0
    %640 = vmatpush1.xpose.msra.mxu0 0.0
    %641 = vmatprep.subr.mxu0 0.0
    %642 = vmatpush1.xpose.msra.mxu0 0.0
    %643 = vmatprep.subr.mxu0 0.0
    %644 = vmatpush1.xpose.msra.mxu0 0.0
    %645 = vmatprep.subr.mxu0 0.0
    %646 = vmatpush1.xpose.msra.mxu0 0.0
    %647 = vmatprep.subr.mxu0 0.0
    %648 = vmatpush1.xpose.msra.mxu0 0.0
    %649 = vmatprep.subr.mxu0 0.0
    %650 = vmatpush1.xpose.msra.mxu0 0.0
    %651 = vmatprep.subr.mxu0 0.0
    %652 = vmatpush1.xpose.msra.mxu0 0.0
    %653 = vmatprep.subr.mxu0 0.0
    %654 = vmatpush1.xpose.msra.mxu0 0.0
    %655 = vmatprep.subr.mxu0 0.0
    %656 = vmatpush1.xpose.msra.mxu0 0.0
    %657 = vmatprep.subr.mxu0 0.0
    %658 = vmatpush1.xpose.msra.mxu0 0.0
    %659 = vmatprep.subr.mxu0 0.0
    %660 = vmatpush1.xpose.msra.mxu0 0.0
    %661 = vmatprep.subr.mxu0 0.0
    %662 = vmatpush1.xpose.msra.mxu0 0.0
    %663 = vmatprep.subr.mxu0 0.0
    %664 = vmatpush1.xpose.msra.mxu0 0.0
    %665 = vmatprep.mubr.f32.mxu0 0.0
    %666 = vmatmul.mubr.f32.gmra.mrb[0].mxu0 %v597
    %v667 = vpop.f32.mrb[0].mxu0
    %v668 = vadd.f32 %v211, %v667
    %v669 = vpop.f32.mrb[0].mxu0
    %670 = vdwg.mxu0
    %671 = vrot.lane.b32.xlu0 %v191, 96
    %v672 = vpop.permute.xlu0 %671
    %v673 = vsel %vm216, %v191, 0
    %v675 = vsel %vm216, %v672, 0
    %677 = vmatprep.subr.mxu0 0.0
    %678 = vmatpush1.xpose.msra.mxu0 %v675
    %679 = vmatprep.subr.mxu0 0.0
    %680 = vmatpush1.xpose.msra.mxu0 0.0
    %681 = vmatprep.subr.mxu0 0.0
    %682 = vmatpush1.xpose.msra.mxu0 0.0
    %683 = vmatprep.subr.mxu0 0.0
    %684 = vmatpush1.xpose.msra.mxu0 0.0
    %685 = vmatprep.subr.mxu0 0.0
    %686 = vmatpush1.xpose.msra.mxu0 0.0
    %687 = vmatprep.subr.mxu0 0.0
    %688 = vmatpush1.xpose.msra.mxu0 0.0
    %689 = vmatprep.subr.mxu0 0.0
    %690 = vmatpush1.xpose.msra.mxu0 0.0
    %691 = vmatprep.subr.mxu0 0.0
    %692 = vmatpush1.xpose.msra.mxu0 0.0
    %693 = vmatprep.subr.mxu0 0.0
    %694 = vmatpush1.xpose.msra.mxu0 0.0
    %695 = vmatprep.subr.mxu0 0.0
    %696 = vmatpush1.xpose.msra.mxu0 0.0
    %697 = vmatprep.subr.mxu0 0.0
    %698 = vmatpush1.xpose.msra.mxu0 0.0
    %699 = vmatprep.subr.mxu0 0.0
    %700 = vmatpush1.xpose.msra.mxu0 0.0
    %701 = vmatprep.subr.mxu0 0.0
    %702 = vmatpush1.xpose.msra.mxu0 0.0
    %703 = vmatprep.subr.mxu0 0.0
    %704 = vmatpush1.xpose.msra.mxu0 0.0
    %705 = vmatprep.subr.mxu0 0.0
    %706 = vmatpush1.xpose.msra.mxu0 0.0
    %707 = vmatprep.subr.mxu0 0.0
    %708 = vmatpush1.xpose.msra.mxu0 0.0
    %709 = vmatprep.subr.mxu0 0.0
    %710 = vmatpush1.xpose.msra.mxu0 0.0
    %711 = vmatprep.subr.mxu0 0.0
    %712 = vmatpush1.xpose.msra.mxu0 0.0
    %713 = vmatprep.subr.mxu0 0.0
    %714 = vmatpush1.xpose.msra.mxu0 0.0
    %715 = vmatprep.subr.mxu0 0.0
    %716 = vmatpush1.xpose.msra.mxu0 0.0
    %717 = vmatprep.subr.mxu0 0.0
    %718 = vmatpush1.xpose.msra.mxu0 0.0
    %719 = vmatprep.subr.mxu0 0.0
    %720 = vmatpush1.xpose.msra.mxu0 0.0
    %721 = vmatprep.subr.mxu0 0.0
    %722 = vmatpush1.xpose.msra.mxu0 0.0
    %723 = vmatprep.subr.mxu0 0.0
    %724 = vmatpush1.xpose.msra.mxu0 0.0
    %725 = vmatprep.subr.mxu0 0.0
    %726 = vmatpush1.xpose.msra.mxu0 0.0
    %727 = vmatprep.subr.mxu0 0.0
    %728 = vmatpush1.xpose.msra.mxu0 0.0
    %729 = vmatprep.subr.mxu0 0.0
    %730 = vmatpush1.xpose.msra.mxu0 0.0
    %731 = vmatprep.subr.mxu0 0.0
    %732 = vmatpush1.xpose.msra.mxu0 0.0
    %733 = vmatprep.subr.mxu0 0.0
    %734 = vmatpush1.xpose.msra.mxu0 0.0
    %735 = vmatprep.subr.mxu0 0.0
    %736 = vmatpush1.xpose.msra.mxu0 0.0
    %737 = vmatprep.subr.mxu0 0.0
    %738 = vmatpush1.xpose.msra.mxu0 0.0
    %739 = vmatprep.subr.mxu0 0.0
    %740 = vmatpush1.xpose.msra.mxu0 0.0
    %741 = vmatprep.mubr.f32.mxu0 0.0
    %742 = vmatmul.mubr.f32.gmra.mrb[0].mxu0 %v673
    %v743 = vpop.f32.mrb[0].mxu0
    %v744 = vadd.f32 %v211, %v743
    %v745 = vpop.f32.mrb[0].mxu0
    %746 = vdwg.mxu0
    %747 = vrot.lane.b32.xlu0 %v195, 96
    %v748 = vpop.permute.xlu0 %747
    %v749 = vsel %vm216, %v195, 0
    %v751 = vsel %vm216, %v748, 0
    %753 = vmatprep.subr.mxu0 0.0
    %754 = vmatpush1.xpose.msra.mxu0 %v751
    %755 = vmatprep.subr.mxu0 0.0
    %756 = vmatpush1.xpose.msra.mxu0 0.0
    %757 = vmatprep.subr.mxu0 0.0
    %758 = vmatpush1.xpose.msra.mxu0 0.0
    %759 = vmatprep.subr.mxu0 0.0
    %760 = vmatpush1.xpose.msra.mxu0 0.0
    %761 = vmatprep.subr.mxu0 0.0
    %762 = vmatpush1.xpose.msra.mxu0 0.0
    %763 = vmatprep.subr.mxu0 0.0
    %764 = vmatpush1.xpose.msra.mxu0 0.0
    %765 = vmatprep.subr.mxu0 0.0
    %766 = vmatpush1.xpose.msra.mxu0 0.0
    %767 = vmatprep.subr.mxu0 0.0
    %768 = vmatpush1.xpose.msra.mxu0 0.0
    %769 = vmatprep.subr.mxu0 0.0
    %770 = vmatpush1.xpose.msra.mxu0 0.0
    %771 = vmatprep.subr.mxu0 0.0
    %772 = vmatpush1.xpose.msra.mxu0 0.0
    %773 = vmatprep.subr.mxu0 0.0
    %774 = vmatpush1.xpose.msra.mxu0 0.0
    %775 = vmatprep.subr.mxu0 0.0
    %776 = vmatpush1.xpose.msra.mxu0 0.0
    %777 = vmatprep.subr.mxu0 0.0
    %778 = vmatpush1.xpose.msra.mxu0 0.0
    %779 = vmatprep.subr.mxu0 0.0
    %780 = vmatpush1.xpose.msra.mxu0 0.0
    %781 = vmatprep.subr.mxu0 0.0
    %782 = vmatpush1.xpose.msra.mxu0 0.0
    %783 = vmatprep.subr.mxu0 0.0
    %784 = vmatpush1.xpose.msra.mxu0 0.0
    %785 = vmatprep.subr.mxu0 0.0
    %786 = vmatpush1.xpose.msra.mxu0 0.0
    %787 = vmatprep.subr.mxu0 0.0
    %788 = vmatpush1.xpose.msra.mxu0 0.0
    %789 = vmatprep.subr.mxu0 0.0
    %790 = vmatpush1.xpose.msra.mxu0 0.0
    %791 = vmatprep.subr.mxu0 0.0
    %792 = vmatpush1.xpose.msra.mxu0 0.0
    %793 = vmatprep.subr.mxu0 0.0
    %794 = vmatpush1.xpose.msra.mxu0 0.0
    %795 = vmatprep.subr.mxu0 0.0
    %796 = vmatpush1.xpose.msra.mxu0 0.0
    %797 = vmatprep.subr.mxu0 0.0
    %798 = vmatpush1.xpose.msra.mxu0 0.0
    %799 = vmatprep.subr.mxu0 0.0
    %800 = vmatpush1.xpose.msra.mxu0 0.0
    %801 = vmatprep.subr.mxu0 0.0
    %802 = vmatpush1.xpose.msra.mxu0 0.0
    %803 = vmatprep.subr.mxu0 0.0
    %804 = vmatpush1.xpose.msra.mxu0 0.0
    %805 = vmatprep.subr.mxu0 0.0
    %806 = vmatpush1.xpose.msra.mxu0 0.0
    %807 = vmatprep.subr.mxu0 0.0
    %808 = vmatpush1.xpose.msra.mxu0 0.0
    %809 = vmatprep.subr.mxu0 0.0
    %810 = vmatpush1.xpose.msra.mxu0 0.0
    %811 = vmatprep.subr.mxu0 0.0
    %812 = vmatpush1.xpose.msra.mxu0 0.0
    %813 = vmatprep.subr.mxu0 0.0
    %814 = vmatpush1.xpose.msra.mxu0 0.0
    %815 = vmatprep.subr.mxu0 0.0
    %816 = vmatpush1.xpose.msra.mxu0 0.0
    %817 = vmatprep.mubr.f32.mxu0 0.0
    %818 = vmatmul.mubr.f32.gmra.mrb[0].mxu0 %v749
    %v819 = vpop.f32.mrb[0].mxu0
    %v820 = vadd.f32 %v211, %v819
    %v821 = vpop.f32.mrb[0].mxu0
    %822 = vdwg.mxu0
    %v823 = vsel %vm216, %v288, -inf
    %824 = vmax.xlane.f32.xlu0 %v823
    %v825 = vpop.xlane.xlu0 %824
    %v826 = vsel %vm216, %v364, -inf
    %827 = vmax.xlane.f32.xlu0 %v826
    %v828 = vpop.xlane.xlu0 %827
    %v829 = vsel %vm216, %v440, -inf
    %830 = vmax.xlane.f32.xlu0 %v829
    %v831 = vpop.xlane.xlu0 %830
    %v832 = vsel %vm216, %v516, -inf
    %833 = vmax.xlane.f32.xlu0 %v832
    %v834 = vpop.xlane.xlu0 %833
    %v835 = vsel %vm216, %v592, -inf
    %836 = vmax.xlane.f32.xlu0 %v835
    %v837 = vpop.xlane.xlu0 %836
    %v838 = vsel %vm216, %v668, -inf
    %839 = vmax.xlane.f32.xlu0 %v838
    %v840 = vpop.xlane.xlu0 %839
    %v841 = vsel %vm216, %v744, -inf
    %842 = vmax.xlane.f32.xlu0 %v841
    %v843 = vpop.xlane.xlu0 %842
    %v844 = vsel %vm216, %v820, -inf
    %845 = vmax.xlane.f32.xlu0 %v844
    %v846 = vpop.xlane.xlu0 %845
    %v847 = vsub.f32 %v288, %v825
    %v848 = vsub.f32 %v364, %v828
    %v849 = vsub.f32 %v440, %v831
    %v850 = vsub.f32 %v516, %v834
    %v851 = vsub.f32 %v592, %v837
    %v852 = vsub.f32 %v668, %v840
    %v853 = vsub.f32 %v744, %v843
    %v854 = vsub.f32 %v820, %v846
    %v855 = vmul.f32 %v847, 1.442695
    %v856 = vpow.pop %v855
    %v857 = vmul.f32 %v848, 1.442695
    %v858 = vpow.pop %v857
    %v859 = vmul.f32 %v849, 1.442695
    %v860 = vpow.pop %v859
    %v861 = vmul.f32 %v850, 1.442695
    %v862 = vpow.pop %v861
    %v863 = vmul.f32 %v851, 1.442695
    %v864 = vpow.pop %v863
    %v865 = vmul.f32 %v852, 1.442695
    %v866 = vpow.pop %v865
    %v867 = vmul.f32 %v853, 1.442695
    %v868 = vpow.pop %v867
    %v869 = vmul.f32 %v854, 1.442695
    %v870 = vpow.pop %v869
    %v871 = vsel %vm216, %v856, 0.0
    %872 = vadd.xlane.f32.xlu0 %v871
    %v873 = vpop.xlane.xlu0 %872
    %v874 = vsel %vm216, %v858, 0.0
    %875 = vadd.xlane.f32.xlu0 %v874
    %v876 = vpop.xlane.xlu0 %875
    %v877 = vsel %vm216, %v860, 0.0
    %878 = vadd.xlane.f32.xlu0 %v877
    %v879 = vpop.xlane.xlu0 %878
    %v880 = vsel %vm216, %v862, 0.0
    %881 = vadd.xlane.f32.xlu0 %v880
    %v882 = vpop.xlane.xlu0 %881
    %v883 = vsel %vm216, %v864, 0.0
    %884 = vadd.xlane.f32.xlu0 %v883
    %v885 = vpop.xlane.xlu0 %884
    %v886 = vsel %vm216, %v866, 0.0
    %887 = vadd.xlane.f32.xlu0 %v886
    %v888 = vpop.xlane.xlu0 %887
    %v889 = vsel %vm216, %v868, 0.0
    %890 = vadd.xlane.f32.xlu0 %v889
    %v891 = vpop.xlane.xlu0 %890
    %v892 = vsel %vm216, %v870, 0.0
    %893 = vadd.xlane.f32.xlu0 %v892
    %v894 = vpop.xlane.xlu0 %893
    %v895 = vrcp.pop %v873
    %v896 = vmul.f32 %v856, %v895
    %v897 = vrcp.pop %v876
    %v898 = vmul.f32 %v858, %v897
    %v899 = vrcp.pop %v879
    %v900 = vmul.f32 %v860, %v899
    %v901 = vrcp.pop %v882
    %v902 = vmul.f32 %v862, %v901
    %v903 = vrcp.pop %v885
    %v904 = vmul.f32 %v864, %v903
    %v905 = vrcp.pop %v888
    %v906 = vmul.f32 %v866, %v905
    %v907 = vrcp.pop %v891
    %v908 = vmul.f32 %v868, %v907
    %v909 = vrcp.pop %v894
    %v910 = vmul.f32 %v870, %v909
    %911 = vrot.lane.b32.xlu0 %v174, 64
    %v912 = vpop.permute.xlu0 %911
    %v915 = vsel %vm216, %v896, 0
    %917 = vmatprep.subr.mxu0 0.0
    %918 = vmatpush1.msra.mxu0 %v912
    %919 = vmatprep.subr.mxu0 0.0
    %920 = vmatpush1.msra.mxu0 0.0
    %921 = vmatprep.subr.mxu0 0.0
    %922 = vmatpush1.msra.mxu0 0.0
    %923 = vmatprep.subr.mxu0 0.0
    %924 = vmatpush1.msra.mxu0 0.0
    %925 = vmatprep.subr.mxu0 0.0
    %926 = vmatpush1.msra.mxu0 0.0
    %927 = vmatprep.subr.mxu0 0.0
    %928 = vmatpush1.msra.mxu0 0.0
    %929 = vmatprep.subr.mxu0 0.0
    %930 = vmatpush1.msra.mxu0 0.0
    %931 = vmatprep.subr.mxu0 0.0
    %932 = vmatpush1.msra.mxu0 0.0
    %933 = vmatprep.subr.mxu0 0.0
    %934 = vmatpush1.msra.mxu0 0.0
    %935 = vmatprep.subr.mxu0 0.0
    %936 = vmatpush1.msra.mxu0 0.0
    %937 = vmatprep.subr.mxu0 0.0
    %938 = vmatpush1.msra.mxu0 0.0
    %939 = vmatprep.subr.mxu0 0.0
    %940 = vmatpush1.msra.mxu0 0.0
    %941 = vmatprep.subr.mxu0 0.0
    %942 = vmatpush1.msra.mxu0 0.0
    %943 = vmatprep.subr.mxu0 0.0
    %944 = vmatpush1.msra.mxu0 0.0
    %945 = vmatprep.subr.mxu0 0.0
    %946 = vmatpush1.msra.mxu0 0.0
    %947 = vmatprep.subr.mxu0 0.0
    %948 = vmatpush1.msra.mxu0 0.0
    %949 = vmatprep.subr.mxu0 0.0
    %950 = vmatpush1.msra.mxu0 0.0
    %951 = vmatprep.subr.mxu0 0.0
    %952 = vmatpush1.msra.mxu0 0.0
    %953 = vmatprep.subr.mxu0 0.0
    %954 = vmatpush1.msra.mxu0 0.0
    %955 = vmatprep.subr.mxu0 0.0
    %956 = vmatpush1.msra.mxu0 0.0
    %957 = vmatprep.subr.mxu0 0.0
    %958 = vmatpush1.msra.mxu0 0.0
    %959 = vmatprep.subr.mxu0 0.0
    %960 = vmatpush1.msra.mxu0 0.0
    %961 = vmatprep.subr.mxu0 0.0
    %962 = vmatpush1.msra.mxu0 0.0
    %963 = vmatprep.subr.mxu0 0.0
    %964 = vmatpush1.msra.mxu0 0.0
    %965 = vmatprep.subr.mxu0 0.0
    %966 = vmatpush1.msra.mxu0 0.0
    %967 = vmatprep.subr.mxu0 0.0
    %968 = vmatpush1.msra.mxu0 0.0
    %969 = vmatprep.subr.mxu0 0.0
    %970 = vmatpush1.msra.mxu0 0.0
    %971 = vmatprep.subr.mxu0 0.0
    %972 = vmatpush1.msra.mxu0 0.0
    %973 = vmatprep.subr.mxu0 0.0
    %974 = vmatpush1.msra.mxu0 0.0
    %975 = vmatprep.subr.mxu0 0.0
    %976 = vmatpush1.msra.mxu0 0.0
    %977 = vmatprep.subr.mxu0 0.0
    %978 = vmatpush1.msra.mxu0 0.0
    %979 = vmatprep.subr.mxu0 0.0
    %980 = vmatpush1.msra.mxu0 0.0
    %981 = vmatprep.mubr.f32.mxu0 0.0
    %982 = vmatmul.mubr.f32.gmra.mrb[0].mxu0 %v915
    %v983 = vpop.f32.mrb[0].mxu0
    %v984 = vadd.f32 0.0, %v983
    %v985 = vpop.f32.mrb[0].mxu0
    %986 = vdwg.mxu0
    %987 = vrot.lane.b32.xlu0 %v185, 64
    %v988 = vpop.permute.xlu0 %987
    %v991 = vsel %vm216, %v898, 0
    %993 = vmatprep.subr.mxu0 0.0
    %994 = vmatpush1.msra.mxu0 %v988
    %995 = vmatprep.subr.mxu0 0.0
    %996 = vmatpush1.msra.mxu0 0.0
    %997 = vmatprep.subr.mxu0 0.0
    %998 = vmatpush1.msra.mxu0 0.0
    %999 = vmatprep.subr.mxu0 0.0
    %1000 = vmatpush1.msra.mxu0 0.0
    %1001 = vmatprep.subr.mxu0 0.0
    %1002 = vmatpush1.msra.mxu0 0.0
    %1003 = vmatprep.subr.mxu0 0.0
    %1004 = vmatpush1.msra.mxu0 0.0
    %1005 = vmatprep.subr.mxu0 0.0
    %1006 = vmatpush1.msra.mxu0 0.0
    %1007 = vmatprep.subr.mxu0 0.0
    %1008 = vmatpush1.msra.mxu0 0.0
    %1009 = vmatprep.subr.mxu0 0.0
    %1010 = vmatpush1.msra.mxu0 0.0
    %1011 = vmatprep.subr.mxu0 0.0
    %1012 = vmatpush1.msra.mxu0 0.0
    %1013 = vmatprep.subr.mxu0 0.0
    %1014 = vmatpush1.msra.mxu0 0.0
    %1015 = vmatprep.subr.mxu0 0.0
    %1016 = vmatpush1.msra.mxu0 0.0
    %1017 = vmatprep.subr.mxu0 0.0
    %1018 = vmatpush1.msra.mxu0 0.0
    %1019 = vmatprep.subr.mxu0 0.0
    %1020 = vmatpush1.msra.mxu0 0.0
    %1021 = vmatprep.subr.mxu0 0.0
    %1022 = vmatpush1.msra.mxu0 0.0
    %1023 = vmatprep.subr.mxu0 0.0
    %1024 = vmatpush1.msra.mxu0 0.0
    %1025 = vmatprep.subr.mxu0 0.0
    %1026 = vmatpush1.msra.mxu0 0.0
    %1027 = vmatprep.subr.mxu0 0.0
    %1028 = vmatpush1.msra.mxu0 0.0
    %1029 = vmatprep.subr.mxu0 0.0
    %1030 = vmatpush1.msra.mxu0 0.0
    %1031 = vmatprep.subr.mxu0 0.0
    %1032 = vmatpush1.msra.mxu0 0.0
    %1033 = vmatprep.subr.mxu0 0.0
    %1034 = vmatpush1.msra.mxu0 0.0
    %1035 = vmatprep.subr.mxu0 0.0
    %1036 = vmatpush1.msra.mxu0 0.0
    %1037 = vmatprep.subr.mxu0 0.0
    %1038 = vmatpush1.msra.mxu0 0.0
    %1039 = vmatprep.subr.mxu0 0.0
    %1040 = vmatpush1.msra.mxu0 0.0
    %1041 = vmatprep.subr.mxu0 0.0
    %1042 = vmatpush1.msra.mxu0 0.0
    %1043 = vmatprep.subr.mxu0 0.0
    %1044 = vmatpush1.msra.mxu0 0.0
    %1045 = vmatprep.subr.mxu0 0.0
    %1046 = vmatpush1.msra.mxu0 0.0
    %1047 = vmatprep.subr.mxu0 0.0
    %1048 = vmatpush1.msra.mxu0 0.0
    %1049 = vmatprep.subr.mxu0 0.0
    %1050 = vmatpush1.msra.mxu0 0.0
    %1051 = vmatprep.subr.mxu0 0.0
    %1052 = vmatpush1.msra.mxu0 0.0
    %1053 = vmatprep.subr.mxu0 0.0
    %1054 = vmatpush1.msra.mxu0 0.0
    %1055 = vmatprep.subr.mxu0 0.0
    %1056 = vmatpush1.msra.mxu0 0.0
    %1057 = vmatprep.mubr.f32.mxu0 0.0
    %1058 = vmatmul.mubr.f32.gmra.mrb[0].mxu0 %v991
    %v1059 = vpop.f32.mrb[0].mxu0
    %v1060 = vadd.f32 0.0, %v1059
    %v1061 = vpop.f32.mrb[0].mxu0
    %1062 = vdwg.mxu0
    %1063 = vrot.lane.b32.xlu0 %v189, 64
    %v1064 = vpop.permute.xlu0 %1063
    %v1067 = vsel %vm216, %v900, 0
    %1069 = vmatprep.subr.mxu0 0.0
    %1070 = vmatpush1.msra.mxu0 %v1064
    %1071 = vmatprep.subr.mxu0 0.0
    %1072 = vmatpush1.msra.mxu0 0.0
    %1073 = vmatprep.subr.mxu0 0.0
    %1074 = vmatpush1.msra.mxu0 0.0
    %1075 = vmatprep.subr.mxu0 0.0
    %1076 = vmatpush1.msra.mxu0 0.0
    %1077 = vmatprep.subr.mxu0 0.0
    %1078 = vmatpush1.msra.mxu0 0.0
    %1079 = vmatprep.subr.mxu0 0.0
    %1080 = vmatpush1.msra.mxu0 0.0
    %1081 = vmatprep.subr.mxu0 0.0
    %1082 = vmatpush1.msra.mxu0 0.0
    %1083 = vmatprep.subr.mxu0 0.0
    %1084 = vmatpush1.msra.mxu0 0.0
    %1085 = vmatprep.subr.mxu0 0.0
    %1086 = vmatpush1.msra.mxu0 0.0
    %1087 = vmatprep.subr.mxu0 0.0
    %1088 = vmatpush1.msra.mxu0 0.0
    %1089 = vmatprep.subr.mxu0 0.0
    %1090 = vmatpush1.msra.mxu0 0.0
    %1091 = vmatprep.subr.mxu0 0.0
    %1092 = vmatpush1.msra.mxu0 0.0
    %1093 = vmatprep.subr.mxu0 0.0
    %1094 = vmatpush1.msra.mxu0 0.0
    %1095 = vmatprep.subr.mxu0 0.0
    %1096 = vmatpush1.msra.mxu0 0.0
    %1097 = vmatprep.subr.mxu0 0.0
    %1098 = vmatpush1.msra.mxu0 0.0
    %1099 = vmatprep.subr.mxu0 0.0
    %1100 = vmatpush1.msra.mxu0 0.0
    %1101 = vmatprep.subr.mxu0 0.0
    %1102 = vmatpush1.msra.mxu0 0.0
    %1103 = vmatprep.subr.mxu0 0.0
    %1104 = vmatpush1.msra.mxu0 0.0
    %1105 = vmatprep.subr.mxu0 0.0
    %1106 = vmatpush1.msra.mxu0 0.0
    %1107 = vmatprep.subr.mxu0 0.0
    %1108 = vmatpush1.msra.mxu0 0.0
    %1109 = vmatprep.subr.mxu0 0.0
    %1110 = vmatpush1.msra.mxu0 0.0
    %1111 = vmatprep.subr.mxu0 0.0
    %1112 = vmatpush1.msra.mxu0 0.0
    %1113 = vmatprep.subr.mxu0 0.0
    %1114 = vmatpush1.msra.mxu0 0.0
    %1115 = vmatprep.subr.mxu0 0.0
    %1116 = vmatpush1.msra.mxu0 0.0
    %1117 = vmatprep.subr.mxu0 0.0
    %1118 = vmatpush1.msra.mxu0 0.0
    %1119 = vmatprep.subr.mxu0 0.0
    %1120 = vmatpush1.msra.mxu0 0.0
    %1121 = vmatprep.subr.mxu0 0.0
    %1122 = vmatpush1.msra.mxu0 0.0
    %1123 = vmatprep.subr.mxu0 0.0
    %1124 = vmatpush1.msra.mxu0 0.0
    %1125 = vmatprep.subr.mxu0 0.0
    %1126 = vmatpush1.msra.mxu0 0.0
    %1127 = vmatprep.subr.mxu0 0.0
    %1128 = vmatpush1.msra.mxu0 0.0
    %1129 = vmatprep.subr.mxu0 0.0
    %1130 = vmatpush1.msra.mxu0 0.0
    %1131 = vmatprep.subr.mxu0 0.0
    %1132 = vmatpush1.msra.mxu0 0.0
    %1133 = vmatprep.mubr.f32.mxu0 0.0
    %1134 = vmatmul.mubr.f32.gmra.mrb[0].mxu0 %v1067
    %v1135 = vpop.f32.mrb[0].mxu0
    %v1136 = vadd.f32 0.0, %v1135
    %v1137 = vpop.f32.mrb[0].mxu0
    %1138 = vdwg.mxu0
    %1139 = vrot.lane.b32.xlu0 %v193, 64
    %v1140 = vpop.permute.xlu0 %1139
    %v1143 = vsel %vm216, %v902, 0
    %1145 = vmatprep.subr.mxu0 0.0
    %1146 = vmatpush1.msra.mxu0 %v1140
    %1147 = vmatprep.subr.mxu0 0.0
    %1148 = vmatpush1.msra.mxu0 0.0
    %1149 = vmatprep.subr.mxu0 0.0
    %1150 = vmatpush1.msra.mxu0 0.0
    %1151 = vmatprep.subr.mxu0 0.0
    %1152 = vmatpush1.msra.mxu0 0.0
    %1153 = vmatprep.subr.mxu0 0.0
    %1154 = vmatpush1.msra.mxu0 0.0
    %1155 = vmatprep.subr.mxu0 0.0
    %1156 = vmatpush1.msra.mxu0 0.0
    %1157 = vmatprep.subr.mxu0 0.0
    %1158 = vmatpush1.msra.mxu0 0.0
    %1159 = vmatprep.subr.mxu0 0.0
    %1160 = vmatpush1.msra.mxu0 0.0
    %1161 = vmatprep.subr.mxu0 0.0
    %1162 = vmatpush1.msra.mxu0 0.0
    %1163 = vmatprep.subr.mxu0 0.0
    %1164 = vmatpush1.msra.mxu0 0.0
    %1165 = vmatprep.subr.mxu0 0.0
    %1166 = vmatpush1.msra.mxu0 0.0
    %1167 = vmatprep.subr.mxu0 0.0
    %1168 = vmatpush1.msra.mxu0 0.0
    %1169 = vmatprep.subr.mxu0 0.0
    %1170 = vmatpush1.msra.mxu0 0.0
    %1171 = vmatprep.subr.mxu0 0.0
    %1172 = vmatpush1.msra.mxu0 0.0
    %1173 = vmatprep.subr.mxu0 0.0
    %1174 = vmatpush1.msra.mxu0 0.0
    %1175 = vmatprep.subr.mxu0 0.0
    %1176 = vmatpush1.msra.mxu0 0.0
    %1177 = vmatprep.subr.mxu0 0.0
    %1178 = vmatpush1.msra.mxu0 0.0
    %1179 = vmatprep.subr.mxu0 0.0
    %1180 = vmatpush1.msra.mxu0 0.0
    %1181 = vmatprep.subr.mxu0 0.0
    %1182 = vmatpush1.msra.mxu0 0.0
    %1183 = vmatprep.subr.mxu0 0.0
    %1184 = vmatpush1.msra.mxu0 0.0
    %1185 = vmatprep.subr.mxu0 0.0
    %1186 = vmatpush1.msra.mxu0 0.0
    %1187 = vmatprep.subr.mxu0 0.0
    %1188 = vmatpush1.msra.mxu0 0.0
    %1189 = vmatprep.subr.mxu0 0.0
    %1190 = vmatpush1.msra.mxu0 0.0
    %1191 = vmatprep.subr.mxu0 0.0
    %1192 = vmatpush1.msra.mxu0 0.0
    %1193 = vmatprep.subr.mxu0 0.0
    %1194 = vmatpush1.msra.mxu0 0.0
    %1195 = vmatprep.subr.mxu0 0.0
    %1196 = vmatpush1.msra.mxu0 0.0
    %1197 = vmatprep.subr.mxu0 0.0
    %1198 = vmatpush1.msra.mxu0 0.0
    %1199 = vmatprep.subr.mxu0 0.0
    %1200 = vmatpush1.msra.mxu0 0.0
    %1201 = vmatprep.subr.mxu0 0.0
    %1202 = vmatpush1.msra.mxu0 0.0
    %1203 = vmatprep.subr.mxu0 0.0
    %1204 = vmatpush1.msra.mxu0 0.0
    %1205 = vmatprep.subr.mxu0 0.0
    %1206 = vmatpush1.msra.mxu0 0.0
    %1207 = vmatprep.subr.mxu0 0.0
    %1208 = vmatpush1.msra.mxu0 0.0
    %1209 = vmatprep.mubr.f32.mxu0 0.0
    %1210 = vmatmul.mubr.f32.gmra.mrb[0].mxu0 %v1143
    %v1211 = vpop.f32.mrb[0].mxu0
    %v1212 = vadd.f32 0.0, %v1211
    %v1213 = vpop.f32.mrb[0].mxu0
    %1214 = vdwg.mxu0
    %1215 = vrot.lane.b32.xlu0 %v179, 64
    %v1216 = vpop.permute.xlu0 %1215
    %v1219 = vsel %vm216, %v904, 0
    %1221 = vmatprep.subr.mxu0 0.0
    %1222 = vmatpush1.msra.mxu0 %v1216
    %1223 = vmatprep.subr.mxu0 0.0
    %1224 = vmatpush1.msra.mxu0 0.0
    %1225 = vmatprep.subr.mxu0 0.0
    %1226 = vmatpush1.msra.mxu0 0.0
    %1227 = vmatprep.subr.mxu0 0.0
    %1228 = vmatpush1.msra.mxu0 0.0
    %1229 = vmatprep.subr.mxu0 0.0
    %1230 = vmatpush1.msra.mxu0 0.0
    %1231 = vmatprep.subr.mxu0 0.0
    %1232 = vmatpush1.msra.mxu0 0.0
    %1233 = vmatprep.subr.mxu0 0.0
    %1234 = vmatpush1.msra.mxu0 0.0
    %1235 = vmatprep.subr.mxu0 0.0
    %1236 = vmatpush1.msra.mxu0 0.0
    %1237 = vmatprep.subr.mxu0 0.0
    %1238 = vmatpush1.msra.mxu0 0.0
    %1239 = vmatprep.subr.mxu0 0.0
    %1240 = vmatpush1.msra.mxu0 0.0
    %1241 = vmatprep.subr.mxu0 0.0
    %1242 = vmatpush1.msra.mxu0 0.0
    %1243 = vmatprep.subr.mxu0 0.0
    %1244 = vmatpush1.msra.mxu0 0.0
    %1245 = vmatprep.subr.mxu0 0.0
    %1246 = vmatpush1.msra.mxu0 0.0
    %1247 = vmatprep.subr.mxu0 0.0
    %1248 = vmatpush1.msra.mxu0 0.0
    %1249 = vmatprep.subr.mxu0 0.0
    %1250 = vmatpush1.msra.mxu0 0.0
    %1251 = vmatprep.subr.mxu0 0.0
    %1252 = vmatpush1.msra.mxu0 0.0
    %1253 = vmatprep.subr.mxu0 0.0
    %1254 = vmatpush1.msra.mxu0 0.0
    %1255 = vmatprep.subr.mxu0 0.0
    %1256 = vmatpush1.msra.mxu0 0.0
    %1257 = vmatprep.subr.mxu0 0.0
    %1258 = vmatpush1.msra.mxu0 0.0
    %1259 = vmatprep.subr.mxu0 0.0
    %1260 = vmatpush1.msra.mxu0 0.0
    %1261 = vmatprep.subr.mxu0 0.0
    %1262 = vmatpush1.msra.mxu0 0.0
    %1263 = vmatprep.subr.mxu0 0.0
    %1264 = vmatpush1.msra.mxu0 0.0
    %1265 = vmatprep.subr.mxu0 0.0
    %1266 = vmatpush1.msra.mxu0 0.0
    %1267 = vmatprep.subr.mxu0 0.0
    %1268 = vmatpush1.msra.mxu0 0.0
    %1269 = vmatprep.subr.mxu0 0.0
    %1270 = vmatpush1.msra.mxu0 0.0
    %1271 = vmatprep.subr.mxu0 0.0
    %1272 = vmatpush1.msra.mxu0 0.0
    %1273 = vmatprep.subr.mxu0 0.0
    %1274 = vmatpush1.msra.mxu0 0.0
    %1275 = vmatprep.subr.mxu0 0.0
    %1276 = vmatpush1.msra.mxu0 0.0
    %1277 = vmatprep.subr.mxu0 0.0
    %1278 = vmatpush1.msra.mxu0 0.0
    %1279 = vmatprep.subr.mxu0 0.0
    %1280 = vmatpush1.msra.mxu0 0.0
    %1281 = vmatprep.subr.mxu0 0.0
    %1282 = vmatpush1.msra.mxu0 0.0
    %1283 = vmatprep.subr.mxu0 0.0
    %1284 = vmatpush1.msra.mxu0 0.0
    %1285 = vmatprep.mubr.f32.mxu0 0.0
    %1286 = vmatmul.mubr.f32.gmra.mrb[0].mxu0 %v1219
    %v1287 = vpop.f32.mrb[0].mxu0
    %v1288 = vadd.f32 0.0, %v1287
    %v1289 = vpop.f32.mrb[0].mxu0
    %1290 = vdwg.mxu0
    %1291 = vrot.lane.b32.xlu0 %v187, 64
    %v1292 = vpop.permute.xlu0 %1291
    %v1295 = vsel %vm216, %v906, 0
    %1297 = vmatprep.subr.mxu0 0.0
    %1298 = vmatpush1.msra.mxu0 %v1292
    %1299 = vmatprep.subr.mxu0 0.0
    %1300 = vmatpush1.msra.mxu0 0.0
    %1301 = vmatprep.subr.mxu0 0.0
    %1302 = vmatpush1.msra.mxu0 0.0
    %1303 = vmatprep.subr.mxu0 0.0
    %1304 = vmatpush1.msra.mxu0 0.0
    %1305 = vmatprep.subr.mxu0 0.0
    %1306 = vmatpush1.msra.mxu0 0.0
    %1307 = vmatprep.subr.mxu0 0.0
    %1308 = vmatpush1.msra.mxu0 0.0
    %1309 = vmatprep.subr.mxu0 0.0
    %1310 = vmatpush1.msra.mxu0 0.0
    %1311 = vmatprep.subr.mxu0 0.0
    %1312 = vmatpush1.msra.mxu0 0.0
    %1313 = vmatprep.subr.mxu0 0.0
    %1314 = vmatpush1.msra.mxu0 0.0
    %1315 = vmatprep.subr.mxu0 0.0
    %1316 = vmatpush1.msra.mxu0 0.0
    %1317 = vmatprep.subr.mxu0 0.0
    %1318 = vmatpush1.msra.mxu0 0.0
    %1319 = vmatprep.subr.mxu0 0.0
    %1320 = vmatpush1.msra.mxu0 0.0
    %1321 = vmatprep.subr.mxu0 0.0
    %1322 = vmatpush1.msra.mxu0 0.0
    %1323 = vmatprep.subr.mxu0 0.0
    %1324 = vmatpush1.msra.mxu0 0.0
    %1325 = vmatprep.subr.mxu0 0.0
    %1326 = vmatpush1.msra.mxu0 0.0
    %1327 = vmatprep.subr.mxu0 0.0
    %1328 = vmatpush1.msra.mxu0 0.0
    %1329 = vmatprep.subr.mxu0 0.0
    %1330 = vmatpush1.msra.mxu0 0.0
    %1331 = vmatprep.subr.mxu0 0.0
    %1332 = vmatpush1.msra.mxu0 0.0
    %1333 = vmatprep.subr.mxu0 0.0
    %1334 = vmatpush1.msra.mxu0 0.0
    %1335 = vmatprep.subr.mxu0 0.0
    %1336 = vmatpush1.msra.mxu0 0.0
    %1337 = vmatprep.subr.mxu0 0.0
    %1338 = vmatpush1.msra.mxu0 0.0
    %1339 = vmatprep.subr.mxu0 0.0
    %1340 = vmatpush1.msra.mxu0 0.0
    %1341 = vmatprep.subr.mxu0 0.0
    %1342 = vmatpush1.msra.mxu0 0.0
    %1343 = vmatprep.subr.mxu0 0.0
    %1344 = vmatpush1.msra.mxu0 0.0
    %1345 = vmatprep.subr.mxu0 0.0
    %1346 = vmatpush1.msra.mxu0 0.0
    %1347 = vmatprep.subr.mxu0 0.0
    %1348 = vmatpush1.msra.mxu0 0.0
    %1349 = vmatprep.subr.mxu0 0.0
    %1350 = vmatpush1.msra.mxu0 0.0
    %1351 = vmatprep.subr.mxu0 0.0
    %1352 = vmatpush1.msra.mxu0 0.0
    %1353 = vmatprep.subr.mxu0 0.0
    %1354 = vmatpush1.msra.mxu0 0.0
    %1355 = vmatprep.subr.mxu0 0.0
    %1356 = vmatpush1.msra.mxu0 0.0
    %1357 = vmatprep.subr.mxu0 0.0
    %1358 = vmatpush1.msra.mxu0 0.0
    %1359 = vmatprep.subr.mxu0 0.0
    %1360 = vmatpush1.msra.mxu0 0.0
    %1361 = vmatprep.mubr.f32.mxu0 0.0
    %1362 = vmatmul.mubr.f32.gmra.mrb[0].mxu0 %v1295
    %v1363 = vpop.f32.mrb[0].mxu0
    %v1364 = vadd.f32 0.0, %v1363
    %v1365 = vpop.f32.mrb[0].mxu0
    %1366 = vdwg.mxu0
    %1367 = vrot.lane.b32.xlu0 %v191, 64
    %v1368 = vpop.permute.xlu0 %1367
    %v1371 = vsel %vm216, %v908, 0
    %1373 = vmatprep.subr.mxu0 0.0
    %1374 = vmatpush1.msra.mxu0 %v1368
    %1375 = vmatprep.subr.mxu0 0.0
    %1376 = vmatpush1.msra.mxu0 0.0
    %1377 = vmatprep.subr.mxu0 0.0
    %1378 = vmatpush1.msra.mxu0 0.0
    %1379 = vmatprep.subr.mxu0 0.0
    %1380 = vmatpush1.msra.mxu0 0.0
    %1381 = vmatprep.subr.mxu0 0.0
    %1382 = vmatpush1.msra.mxu0 0.0
    %1383 = vmatprep.subr.mxu0 0.0
    %1384 = vmatpush1.msra.mxu0 0.0
    %1385 = vmatprep.subr.mxu0 0.0
    %1386 = vmatpush1.msra.mxu0 0.0
    %1387 = vmatprep.subr.mxu0 0.0
    %1388 = vmatpush1.msra.mxu0 0.0
    %1389 = vmatprep.subr.mxu0 0.0
    %1390 = vmatpush1.msra.mxu0 0.0
    %1391 = vmatprep.subr.mxu0 0.0
    %1392 = vmatpush1.msra.mxu0 0.0
    %1393 = vmatprep.subr.mxu0 0.0
    %1394 = vmatpush1.msra.mxu0 0.0
    %1395 = vmatprep.subr.mxu0 0.0
    %1396 = vmatpush1.msra.mxu0 0.0
    %1397 = vmatprep.subr.mxu0 0.0
    %1398 = vmatpush1.msra.mxu0 0.0
    %1399 = vmatprep.subr.mxu0 0.0
    %1400 = vmatpush1.msra.mxu0 0.0
    %1401 = vmatprep.subr.mxu0 0.0
    %1402 = vmatpush1.msra.mxu0 0.0
    %1403 = vmatprep.subr.mxu0 0.0
    %1404 = vmatpush1.msra.mxu0 0.0
    %1405 = vmatprep.subr.mxu0 0.0
    %1406 = vmatpush1.msra.mxu0 0.0
    %1407 = vmatprep.subr.mxu0 0.0
    %1408 = vmatpush1.msra.mxu0 0.0
    %1409 = vmatprep.subr.mxu0 0.0
    %1410 = vmatpush1.msra.mxu0 0.0
    %1411 = vmatprep.subr.mxu0 0.0
    %1412 = vmatpush1.msra.mxu0 0.0
    %1413 = vmatprep.subr.mxu0 0.0
    %1414 = vmatpush1.msra.mxu0 0.0
    %1415 = vmatprep.subr.mxu0 0.0
    %1416 = vmatpush1.msra.mxu0 0.0
    %1417 = vmatprep.subr.mxu0 0.0
    %1418 = vmatpush1.msra.mxu0 0.0
    %1419 = vmatprep.subr.mxu0 0.0
    %1420 = vmatpush1.msra.mxu0 0.0
    %1421 = vmatprep.subr.mxu0 0.0
    %1422 = vmatpush1.msra.mxu0 0.0
    %1423 = vmatprep.subr.mxu0 0.0
    %1424 = vmatpush1.msra.mxu0 0.0
    %1425 = vmatprep.subr.mxu0 0.0
    %1426 = vmatpush1.msra.mxu0 0.0
    %1427 = vmatprep.subr.mxu0 0.0
    %1428 = vmatpush1.msra.mxu0 0.0
    %1429 = vmatprep.subr.mxu0 0.0
    %1430 = vmatpush1.msra.mxu0 0.0
    %1431 = vmatprep.subr.mxu0 0.0
    %1432 = vmatpush1.msra.mxu0 0.0
    %1433 = vmatprep.subr.mxu0 0.0
    %1434 = vmatpush1.msra.mxu0 0.0
    %1435 = vmatprep.subr.mxu0 0.0
    %1436 = vmatpush1.msra.mxu0 0.0
    %1437 = vmatprep.mubr.f32.mxu0 0.0
    %1438 = vmatmul.mubr.f32.gmra.mrb[0].mxu0 %v1371
    %v1439 = vpop.f32.mrb[0].mxu0
    %v1440 = vadd.f32 0.0, %v1439
    %v1441 = vpop.f32.mrb[0].mxu0
    %1442 = vdwg.mxu0
    %1443 = vrot.lane.b32.xlu0 %v195, 64
    %v1444 = vpop.permute.xlu0 %1443
    %v1447 = vsel %vm216, %v910, 0
    %1449 = vmatprep.subr.mxu0 0.0
    %1450 = vmatpush1.msra.mxu0 %v1444
    %1451 = vmatprep.subr.mxu0 0.0
    %1452 = vmatpush1.msra.mxu0 0.0
    %1453 = vmatprep.subr.mxu0 0.0
    %1454 = vmatpush1.msra.mxu0 0.0
    %1455 = vmatprep.subr.mxu0 0.0
    %1456 = vmatpush1.msra.mxu0 0.0
    %1457 = vmatprep.subr.mxu0 0.0
    %1458 = vmatpush1.msra.mxu0 0.0
    %1459 = vmatprep.subr.mxu0 0.0
    %1460 = vmatpush1.msra.mxu0 0.0
    %1461 = vmatprep.subr.mxu0 0.0
    %1462 = vmatpush1.msra.mxu0 0.0
    %1463 = vmatprep.subr.mxu0 0.0
    %1464 = vmatpush1.msra.mxu0 0.0
    %1465 = vmatprep.subr.mxu0 0.0
    %1466 = vmatpush1.msra.mxu0 0.0
    %1467 = vmatprep.subr.mxu0 0.0
    %1468 = vmatpush1.msra.mxu0 0.0
    %1469 = vmatprep.subr.mxu0 0.0
    %1470 = vmatpush1.msra.mxu0 0.0
    %1471 = vmatprep.subr.mxu0 0.0
    %1472 = vmatpush1.msra.mxu0 0.0
    %1473 = vmatprep.subr.mxu0 0.0
    %1474 = vmatpush1.msra.mxu0 0.0
    %1475 = vmatprep.subr.mxu0 0.0
    %1476 = vmatpush1.msra.mxu0 0.0
    %1477 = vmatprep.subr.mxu0 0.0
    %1478 = vmatpush1.msra.mxu0 0.0
    %1479 = vmatprep.subr.mxu0 0.0
    %1480 = vmatpush1.msra.mxu0 0.0
    %1481 = vmatprep.subr.mxu0 0.0
    %1482 = vmatpush1.msra.mxu0 0.0
    %1483 = vmatprep.subr.mxu0 0.0
    %1484 = vmatpush1.msra.mxu0 0.0
    %1485 = vmatprep.subr.mxu0 0.0
    %1486 = vmatpush1.msra.mxu0 0.0
    %1487 = vmatprep.subr.mxu0 0.0
    %1488 = vmatpush1.msra.mxu0 0.0
    %1489 = vmatprep.subr.mxu0 0.0
    %1490 = vmatpush1.msra.mxu0 0.0
    %1491 = vmatprep.subr.mxu0 0.0
    %1492 = vmatpush1.msra.mxu0 0.0
    %1493 = vmatprep.subr.mxu0 0.0
    %1494 = vmatpush1.msra.mxu0 0.0
    %1495 = vmatprep.subr.mxu0 0.0
    %1496 = vmatpush1.msra.mxu0 0.0
    %1497 = vmatprep.subr.mxu0 0.0
    %1498 = vmatpush1.msra.mxu0 0.0
    %1499 = vmatprep.subr.mxu0 0.0
    %1500 = vmatpush1.msra.mxu0 0.0
    %1501 = vmatprep.subr.mxu0 0.0
    %1502 = vmatpush1.msra.mxu0 0.0
    %1503 = vmatprep.subr.mxu0 0.0
    %1504 = vmatpush1.msra.mxu0 0.0
    %1505 = vmatprep.subr.mxu0 0.0
    %1506 = vmatpush1.msra.mxu0 0.0
    %1507 = vmatprep.subr.mxu0 0.0
    %1508 = vmatpush1.msra.mxu0 0.0
    %1509 = vmatprep.subr.mxu0 0.0
    %1510 = vmatpush1.msra.mxu0 0.0
    %1511 = vmatprep.subr.mxu0 0.0
    %1512 = vmatpush1.msra.mxu0 0.0
    %1513 = vmatprep.mubr.f32.mxu0 0.0
    %1514 = vmatmul.mubr.f32.gmra.mrb[0].mxu0 %v1447
    %v1515 = vpop.f32.mrb[0].mxu0
    %v1516 = vadd.f32 0.0, %v1515
    %v1517 = vpop.f32.mrb[0].mxu0
    %1518 = vdwg.mxu0
    %1521 = vrot.lane.b32.xlu0 %v1060, 8
    %v1522 = vpop.permute.xlu0 %1521
    %1523 = vrot.lane.b32.xlu0 %v1364, 8
    %v1524 = vpop.permute.xlu0 %1523
    %1529 = vrot.lane.b32.xlu0 %v1136, 16
    %v1530 = vpop.permute.xlu0 %1529
    %1531 = vrot.lane.b32.xlu0 %v1440, 16
    %v1532 = vpop.permute.xlu0 %1531
    %1537 = vrot.lane.b32.xlu0 %v1212, 24
    %v1538 = vpop.permute.xlu0 %1537
    %1539 = vrot.lane.b32.xlu0 %v1516, 24
    %v1540 = vpop.permute.xlu0 %1539
    %v1543 = vsel %vm216, %v984, %v1522
    %v1544 = vsel %vm216, %v1288, %v1524
    %vm1545 = vcmask 130048
    %v1546 = vsel %vm1545, %v1543, %v1530
    %v1547 = vsel %vm1545, %v1544, %v1532
    %vm1548 = vcmask 195584
    %v1549 = vsel %vm1548, %v1546, %v1538
    %v1550 = vsel %vm1548, %v1547, %v1540
    %v1551 = vld [vmem:[#allocation5] sm:$0xff]
    %v1552 = vld [vmem:[#allocation5 + $0x10] sm:$0xff]
    %v1553 = vld [vmem:[#allocation5 + $0x20] sm:$0xff]
    %v1554 = vld [vmem:[#allocation5 + $0x30] sm:$0xff]
    %v1555 = vld [vmem:[%s3] sm:$0x1]
    %v1557 = vlaneseq
    %v1558 = vshrl.u32 %v1557, 7
    %v1559 = vsub.s32 0, %v1558
    %v1560 = vrot.slane %v1555, %v1559
    %1565 = vrot.lane.b32.xlu0 %v1551, 32
    %v1566 = vpop.permute.xlu0 %1565
    %1567 = vrot.lane.b32.xlu0 %v1552, 32
    %v1568 = vpop.permute.xlu0 %1567
    %1569 = vrot.lane.b32.xlu0 %v1553, 32
    %v1570 = vpop.permute.xlu0 %1569
    %1571 = vrot.lane.b32.xlu0 %v1554, 32
    %v1572 = vpop.permute.xlu0 %1571
    %1577 = vrot.lane.b32.xlu0 %v1560, 32
    %v1578 = vpop.permute.xlu0 %1577
    %v1581 = vsel %vm48, %v1549, 0
    %v1584 = vsel %vm48, %v1550, 0
    %1586 = vmatprep.subr.mxu0 0.0
    %1587 = vmatpush1.msra.mxu0 %v1566
    %1588 = vmatprep.subr.mxu0 0.0
    %1589 = vmatpush1.msra.mxu0 %v1568
    %1590 = vmatprep.subr.mxu0 0.0
    %1591 = vmatpush1.msra.mxu0 %v1570
    %1592 = vmatprep.subr.mxu0 0.0
    %1593 = vmatpush1.msra.mxu0 %v1572
    %1594 = vmatprep.subr.mxu0 0.0
    %1595 = vmatpush1.msra.mxu0 0.0
    %1596 = vmatprep.subr.mxu0 0.0
    %1597 = vmatpush1.msra.mxu0 0.0
    %1598 = vmatprep.subr.mxu0 0.0
    %1599 = vmatpush1.msra.mxu0 0.0
    %1600 = vmatprep.subr.mxu0 0.0
    %1601 = vmatpush1.msra.mxu0 0.0
    %1602 = vmatprep.subr.mxu0 0.0
    %1603 = vmatpush1.msra.mxu0 0.0
    %1604 = vmatprep.subr.mxu0 0.0
    %1605 = vmatpush1.msra.mxu0 0.0
    %1606 = vmatprep.subr.mxu0 0.0
    %1607 = vmatpush1.msra.mxu0 0.0
    %1608 = vmatprep.subr.mxu0 0.0
    %1609 = vmatpush1.msra.mxu0 0.0
    %1610 = vmatprep.subr.mxu0 0.0
    %1611 = vmatpush1.msra.mxu0 0.0
    %1612 = vmatprep.subr.mxu0 0.0
    %1613 = vmatpush1.msra.mxu0 0.0
    %1614 = vmatprep.subr.mxu0 0.0
    %1615 = vmatpush1.msra.mxu0 0.0
    %1616 = vmatprep.subr.mxu0 0.0
    %1617 = vmatpush1.msra.mxu0 0.0
    %1618 = vmatprep.subr.mxu0 0.0
    %1619 = vmatpush1.msra.mxu0 0.0
    %1620 = vmatprep.subr.mxu0 0.0
    %1621 = vmatpush1.msra.mxu0 0.0
    %1622 = vmatprep.subr.mxu0 0.0
    %1623 = vmatpush1.msra.mxu0 0.0
    %1624 = vmatprep.subr.mxu0 0.0
    %1625 = vmatpush1.msra.mxu0 0.0
    %1626 = vmatprep.subr.mxu0 0.0
    %1627 = vmatpush1.msra.mxu0 0.0
    %1628 = vmatprep.subr.mxu0 0.0
    %1629 = vmatpush1.msra.mxu0 0.0
    %1630 = vmatprep.subr.mxu0 0.0
    %1631 = vmatpush1.msra.mxu0 0.0
    %1632 = vmatprep.subr.mxu0 0.0
    %1633 = vmatpush1.msra.mxu0 0.0
    %1634 = vmatprep.subr.mxu0 0.0
    %1635 = vmatpush1.msra.mxu0 0.0
    %1636 = vmatprep.subr.mxu0 0.0
    %1637 = vmatpush1.msra.mxu0 0.0
    %1638 = vmatprep.subr.mxu0 0.0
    %1639 = vmatpush1.msra.mxu0 0.0
    %1640 = vmatprep.subr.mxu0 0.0
    %1641 = vmatpush1.msra.mxu0 0.0
    %1642 = vmatprep.subr.mxu0 0.0
    %1643 = vmatpush1.msra.mxu0 0.0
    %1644 = vmatprep.subr.mxu0 0.0
    %1645 = vmatpush1.msra.mxu0 0.0
    %1646 = vmatprep.subr.mxu0 0.0
    %1647 = vmatpush1.msra.mxu0 0.0
    %1648 = vmatprep.subr.mxu0 0.0
    %1649 = vmatpush1.msra.mxu0 0.0
    %1650 = vmatprep.mubr.f32.mxu0 0.0
    %1651 = vmatmul.mubr.f32.gmra.mrb[0].mxu0 %v1581
    %v1652 = vpop.f32.mrb[0].mxu0
    %v1653 = vadd.f32 %v1578, %v1652
    %v1654 = vpop.f32.mrb[0].mxu0
    %1655 = vmatprep.mubr.f32.mxu0 0.0
    %1656 = vmatmul.mubr.f32.gmra.mrb[0].mxu0 %v1584
    %v1657 = vpop.f32.mrb[0].mxu0
    %v1658 = vadd.f32 %v1578, %v1657
    %v1659 = vpop.f32.mrb[0].mxu0
    %1660 = vdwg.mxu0
    %v1661 = vadd.f32 %v46, %v1653
    %v1662 = vadd.f32 %v47, %v1658
    %v1663 = vsel %vm48, %v1661, 0.0
    %1664 = vadd.xlane.f32.xlu0 %v1663
    %v1665 = vpop.xlane.xlu0 %1664
    %v1666 = vsel %vm48, %v1662, 0.0
    %1667 = vadd.xlane.f32.xlu0 %v1666
    %v1668 = vpop.xlane.xlu0 %1667
    %v1669 = vmul.f32 %v1665, %v55
    %v1670 = vmul.f32 %v1668, %v55
    %v1671 = vsub.f32 %v1661, %v1669
    %v1672 = vsub.f32 %v1662, %v1670
    %v1673 = vmul.f32 %v1671, %v1671
    %v1674 = vmul.f32 %v1672, %v1672
    %v1675 = vsel %vm48, %v1673, 0.0
    %1676 = vadd.xlane.f32.xlu0 %v1675
    %v1677 = vpop.xlane.xlu0 %1676
    %v1678 = vsel %vm48, %v1674, 0.0
    %1679 = vadd.xlane.f32.xlu0 %v1678
    %v1680 = vpop.xlane.xlu0 %1679
    %v1681 = vmul.f32 %v1677, 0.032258064
    %v1682 = vmul.f32 %v1680, 0.032258064
    %v1683 = vrsqrt.pop %v1681
    %v1684 = vmul.f32 %v1681, %v1683
    %vm1685 = vcmp.eq.f32.partialorder %v1681, inf
    %v1686 = vsel %vm1685, %v1681, %v1684
    %vm1687 = vcmp.eq.f32.partialorder %v1681, 0.0
    %v1688 = vand.u32 %v1681, 2147483648
    %v1689 = vsel %vm1687, %v1688, %v1686
    %v1690 = vrsqrt.pop %v1682
    %v1691 = vmul.f32 %v1682, %v1690
    %vm1692 = vcmp.eq.f32.partialorder %v1682, inf
    %v1693 = vsel %vm1692, %v1682, %v1691
    %vm1694 = vcmp.eq.f32.partialorder %v1682, 0.0
    %v1695 = vand.u32 %v1682, 2147483648
    %v1696 = vsel %vm1694, %v1695, %v1693
    %v1697 = vadd.f32 %v1689, 1e-06
    %v1698 = vadd.f32 %v1696, 1e-06
    %v1699 = vrcp.pop %v1697
    %v1700 = vmul.f32 %v1671, %v1699
    %v1701 = vrcp.pop %v1698
    %v1702 = vmul.f32 %v1672, %v1701
    %v1703 = vld [vmem:[#allocation5 + $0x8] sm:$0xff]
    %v1704 = vld [vmem:[#allocation5 + $0x18] sm:$0xff]
    %v1705 = vld [vmem:[#allocation5 + $0x28] sm:$0xff]
    %v1706 = vld [vmem:[#allocation5 + $0x38] sm:$0xff]
    %v1707 = vld [vmem:[%s3 + $0x1] sm:$0x1]
    %v1709 = vlaneseq
    %v1710 = vshrl.u32 %v1709, 7
    %v1711 = vsub.s32 0, %v1710
    %v1712 = vrot.slane %v1707, %v1711
    %v1715 = vsel %vm48, %v1700, 0
    %v1718 = vsel %vm48, %v1702, 0
    %1720 = vmatprep.subr.mxu0 0.0
    %1721 = vmatpush1.msra.mxu0 %v1703
    %1722 = vmatprep.subr.mxu0 0.0
    %1723 = vmatpush1.msra.mxu0 %v1704
    %1724 = vmatprep.subr.mxu0 0.0
    %1725 = vmatpush1.msra.mxu0 %v1705
    %1726 = vmatprep.subr.mxu0 0.0
    %1727 = vmatpush1.msra.mxu0 %v1706
    %1728 = vmatprep.subr.mxu0 0.0
    %1729 = vmatpush1.msra.mxu0 0.0
    %1730 = vmatprep.subr.mxu0 0.0
    %1731 = vmatpush1.msra.mxu0 0.0
    %1732 = vmatprep.subr.mxu0 0.0
    %1733 = vmatpush1.msra.mxu0 0.0
    %1734 = vmatprep.subr.mxu0 0.0
    %1735 = vmatpush1.msra.mxu0 0.0
    %1736 = vmatprep.subr.mxu0 0.0
    %1737 = vmatpush1.msra.mxu0 0.0
    %1738 = vmatprep.subr.mxu0 0.0
    %1739 = vmatpush1.msra.mxu0 0.0
    %1740 = vmatprep.subr.mxu0 0.0
    %1741 = vmatpush1.msra.mxu0 0.0
    %1742 = vmatprep.subr.mxu0 0.0
    %1743 = vmatpush1.msra.mxu0 0.0
    %1744 = vmatprep.subr.mxu0 0.0
    %1745 = vmatpush1.msra.mxu0 0.0
    %1746 = vmatprep.subr.mxu0 0.0
    %1747 = vmatpush1.msra.mxu0 0.0
    %1748 = vmatprep.subr.mxu0 0.0
    %1749 = vmatpush1.msra.mxu0 0.0
    %1750 = vmatprep.subr.mxu0 0.0
    %1751 = vmatpush1.msra.mxu0 0.0
    %1752 = vmatprep.subr.mxu0 0.0
    %1753 = vmatpush1.msra.mxu0 0.0
    %1754 = vmatprep.subr.mxu0 0.0
    %1755 = vmatpush1.msra.mxu0 0.0
    %1756 = vmatprep.subr.mxu0 0.0
    %1757 = vmatpush1.msra.mxu0 0.0
    %1758 = vmatprep.subr.mxu0 0.0
    %1759 = vmatpush1.msra.mxu0 0.0
    %1760 = vmatprep.subr.mxu0 0.0
    %1761 = vmatpush1.msra.mxu0 0.0
    %1762 = vmatprep.subr.mxu0 0.0
    %1763 = vmatpush1.msra.mxu0 0.0
    %1764 = vmatprep.subr.mxu0 0.0
    %1765 = vmatpush1.msra.mxu0 0.0
    %1766 = vmatprep.subr.mxu0 0.0
    %1767 = vmatpush1.msra.mxu0 0.0
    %1768 = vmatprep.subr.mxu0 0.0
    %1769 = vmatpush1.msra.mxu0 0.0
    %1770 = vmatprep.subr.mxu0 0.0
    %1771 = vmatpush1.msra.mxu0 0.0
    %1772 = vmatprep.subr.mxu0 0.0
    %1773 = vmatpush1.msra.mxu0 0.0
    %1774 = vmatprep.subr.mxu0 0.0
    %1775 = vmatpush1.msra.mxu0 0.0
    %1776 = vmatprep.subr.mxu0 0.0
    %1777 = vmatpush1.msra.mxu0 0.0
    %1778 = vmatprep.subr.mxu0 0.0
    %1779 = vmatpush1.msra.mxu0 0.0
    %1780 = vmatprep.subr.mxu0 0.0
    %1781 = vmatpush1.msra.mxu0 0.0
    %1782 = vmatprep.subr.mxu0 0.0
    %1783 = vmatpush1.msra.mxu0 0.0
    %1784 = vmatprep.mubr.f32.mxu0 0.0
    %1785 = vmatmul.mubr.f32.gmra.mrb[0].mxu0 %v1715
    %v1786 = vpop.f32.mrb[0].mxu0
    %v1787 = vadd.f32 %v1712, %v1786
    %v1788 = vpop.f32.mrb[0].mxu0
    %1789 = vmatprep.mubr.f32.mxu0 0.0
    %1790 = vmatmul.mubr.f32.gmra.mrb[0].mxu0 %v1718
    %v1791 = vpop.f32.mrb[0].mxu0
    %v1792 = vadd.f32 %v1712, %v1791
    %v1793 = vpop.f32.mrb[0].mxu0
    %1794 = vdwg.mxu0
    %v1795 = vmax.f32 %v1787, 0.0
    %v1796 = vmax.f32 %v1792, 0.0
    %v1797 = vld [vmem:[#allocation5 + $0x8] sm:$0xff]
    %v1798 = vld [vmem:[#allocation5 + $0x18] sm:$0xff]
    %v1799 = vld [vmem:[#allocation5 + $0x28] sm:$0xff]
    %v1800 = vld [vmem:[#allocation5 + $0x38] sm:$0xff]
    %v1801 = vld [vmem:[#allocation5 + $0x48] sm:$0xff]
    %v1802 = vld [vmem:[#allocation5 + $0x58] sm:$0xff]
    %v1803 = vld [vmem:[#allocation5 + $0x68] sm:$0xff]
    %v1804 = vld [vmem:[#allocation5 + $0x78] sm:$0xff]
    %1813 = vrot.lane.b32.xlu0 %v1797, 64
    %v1814 = vpop.permute.xlu0 %1813
    %1815 = vrot.lane.b32.xlu0 %v1798, 64
    %v1816 = vpop.permute.xlu0 %1815
    %1817 = vrot.lane.b32.xlu0 %v1799, 64
    %v1818 = vpop.permute.xlu0 %1817
    %1819 = vrot.lane.b32.xlu0 %v1800, 64
    %v1820 = vpop.permute.xlu0 %1819
    %1821 = vrot.lane.b32.xlu0 %v1801, 64
    %v1822 = vpop.permute.xlu0 %1821
    %1823 = vrot.lane.b32.xlu0 %v1802, 64
    %v1824 = vpop.permute.xlu0 %1823
    %1825 = vrot.lane.b32.xlu0 %v1803, 64
    %v1826 = vpop.permute.xlu0 %1825
    %1827 = vrot.lane.b32.xlu0 %v1804, 64
    %v1828 = vpop.permute.xlu0 %1827
    %1837 = vrot.lane.b32.xlu0 %v1712, 64
    %v1838 = vpop.permute.xlu0 %1837
    %vm1840 = vcmask 523264
    %v1842 = vsel %vm1840, %v1795, 0
    %v1845 = vsel %vm1840, %v1796, 0
    %1847 = vmatprep.subr.mxu0 0.0
    %1848 = vmatpush1.msra.mxu0 %v1814
    %1849 = vmatprep.subr.mxu0 0.0
    %1850 = vmatpush1.msra.mxu0 %v1816
    %1851 = vmatprep.subr.mxu0 0.0
    %1852 = vmatpush1.msra.mxu0 %v1818
    %1853 = vmatprep.subr.mxu0 0.0
    %1854 = vmatpush1.msra.mxu0 %v1820
    %1855 = vmatprep.subr.mxu0 0.0
    %1856 = vmatpush1.msra.mxu0 %v1822
    %1857 = vmatprep.subr.mxu0 0.0
    %1858 = vmatpush1.msra.mxu0 %v1824
    %1859 = vmatprep.subr.mxu0 0.0
    %1860 = vmatpush1.msra.mxu0 %v1826
    %1861 = vmatprep.subr.mxu0 0.0
    %1862 = vmatpush1.msra.mxu0 %v1828
    %1863 = vmatprep.subr.mxu0 0.0
    %1864 = vmatpush1.msra.mxu0 0.0
    %1865 = vmatprep.subr.mxu0 0.0
    %1866 = vmatpush1.msra.mxu0 0.0
    %1867 = vmatprep.subr.mxu0 0.0
    %1868 = vmatpush1.msra.mxu0 0.0
    %1869 = vmatprep.subr.mxu0 0.0
    %1870 = vmatpush1.msra.mxu0 0.0
    %1871 = vmatprep.subr.mxu0 0.0
    %1872 = vmatpush1.msra.mxu0 0.0
    %1873 = vmatprep.subr.mxu0 0.0
    %1874 = vmatpush1.msra.mxu0 0.0
    %1875 = vmatprep.subr.mxu0 0.0
    %1876 = vmatpush1.msra.mxu0 0.0
    %1877 = vmatprep.subr.mxu0 0.0
    %1878 = vmatpush1.msra.mxu0 0.0
    %1879 = vmatprep.subr.mxu0 0.0
    %1880 = vmatpush1.msra.mxu0 0.0
    %1881 = vmatprep.subr.mxu0 0.0
    %1882 = vmatpush1.msra.mxu0 0.0
    %1883 = vmatprep.subr.mxu0 0.0
    %1884 = vmatpush1.msra.mxu0 0.0
    %1885 = vmatprep.subr.mxu0 0.0
    %1886 = vmatpush1.msra.mxu0 0.0
    %1887 = vmatprep.subr.mxu0 0.0
    %1888 = vmatpush1.msra.mxu0 0.0
    %1889 = vmatprep.subr.mxu0 0.0
    %1890 = vmatpush1.msra.mxu0 0.0
    %1891 = vmatprep.subr.mxu0 0.0
    %1892 = vmatpush1.msra.mxu0 0.0
    %1893 = vmatprep.subr.mxu0 0.0
    %1894 = vmatpush1.msra.mxu0 0.0
    %1895 = vmatprep.subr.mxu0 0.0
    %1896 = vmatpush1.msra.mxu0 0.0
    %1897 = vmatprep.subr.mxu0 0.0
    %1898 = vmatpush1.msra.mxu0 0.0
    %1899 = vmatprep.subr.mxu0 0.0
    %1900 = vmatpush1.msra.mxu0 0.0
    %1901 = vmatprep.subr.mxu0 0.0
    %1902 = vmatpush1.msra.mxu0 0.0
    %1903 = vmatprep.subr.mxu0 0.0
    %1904 = vmatpush1.msra.mxu0 0.0
    %1905 = vmatprep.subr.mxu0 0.0
    %1906 = vmatpush1.msra.mxu0 0.0
    %1907 = vmatprep.subr.mxu0 0.0
    %1908 = vmatpush1.msra.mxu0 0.0
    %1909 = vmatprep.subr.mxu0 0.0
    %1910 = vmatpush1.msra.mxu0 0.0
    %1911 = vmatprep.mubr.f32.mxu0 0.0
    %1912 = vmatmul.mubr.f32.gmra.mrb[0].mxu0 %v1842
    %v1913 = vpop.f32.mrb[0].mxu0
    %v1914 = vadd.f32 %v1838, %v1913
    %v1915 = vpop.f32.mrb[0].mxu0
    %1916 = vmatprep.mubr.f32.mxu0 0.0
    %1917 = vmatmul.mubr.f32.gmra.mrb[0].mxu0 %v1845
    %v1918 = vpop.f32.mrb[0].mxu0
    %v1919 = vadd.f32 %v1838, %v1918
    %v1920 = vpop.f32.mrb[0].mxu0
    %1921 = vdwg.mxu0
    %v1922 = vadd.f32 %v1661, %v1914
    %v1923 = vadd.f32 %v1662, %v1919
    %1924 = vst.msk [vmem:[#allocation7] sm:$0xff] %vm48, %v1922
    %1925 = vst.msk [vmem:[#allocation7 + $0x8] sm:$0xff] %vm48, %v1923
    // Predicated region
    $region26: #{encoder_layer.1} parent=1 // pred_check
      _
    $region27: #{encoder_layer.1} parent=1 // pred_check_branch
      %1927 = sbr.rel (0) target = $region29
    $region28: #{encoder_layer.1} parent=1 // pred_region
      %s1929 = ssub.s32 256, 256
      %1930 = vsyncadd [#allocation4], %s1929
      %s1931 = sshll.u32 [#allocation7], 4
      %s1932 = int_to_ptr.vmem [resolvable:$true] %s1931
      %1937 = dma.vmem_to_hbm [thread:$0]  %s1932, 256, %s4, [#allocation4], 128, 128, 8
    $region29: #{encoder_layer.1} parent=1 // pred_fallthru
      _
    // Predicated region
    $region30: #{encoder_layer.1} parent=1 // pred_check
      _
    $region31: #{encoder_layer.1} parent=1 // pred_check_branch
      %1939 = sbr.rel (0) target = $region33
    $region32: #{encoder_layer.1} parent=1 // pred_region
      %1940 = dma.done [#allocation4], 256
    $region33: #{encoder_layer.1} parent=1 // pred_fallthru
      _
    %1941 = vsyncpa [#allocation3], 1
    %1942 = vsyncpa [#allocation6], 1
    %1943 = vsyncpa [#allocation4], 1

</llo_original>
